<compile_context>
chip_gen: v7x
topology: tpu7x:2x2x1
jax: 0.10.0
libtpu: 0.0.40
codegen_flags: <defaults>
</compile_context>

<pallas_src>
import jax
import jax.numpy as jnp
from jax.experimental import pallas as pl
from jax.experimental.pallas import tpu as pltpu

B = 2      # batch
T = 8      # sequence length
I = 64     # GRU input size
H = 64     # GRU hidden size
GS = 128   # lane-aligned gate slot width
NG = 3     # gates per projection (r, z, n)
MLP_ROWS = 576   # 64+64 (w1 halves) + 256 (w2) + 128 (w3 pad) + 64 (w4 pad)


def _leaky_relu(x, slope=0.01):
    return jnp.where(x > 0, x, slope * x)


def disc_kernel(x_ref, w_x_ref, b_x_ref, w_h_ref, b_hn_ref, b_mlp_ref,
                w_mlp_hbm, out_ref, w_mlp_vmem, dma_sem):
    # x_ref:      (T*B, I)        row t*B+b = x[b, t]
    # w_x_ref:    (I, 3*GS)       x-side gate weights, slots [r|z|n] @ 0/128/256
    # b_x_ref:    (1, 3*GS)       [b_ir+b_hr | b_iz+b_hz | b_in] in the slots
    # w_h_ref:    (H, 3*GS)       h-side gate weights, same slot layout
    # b_hn_ref:   (1, H)          b_hn (must sit inside the r * (...) term)
    # b_mlp_ref:  (8, 128)        rows: b1[:128], b1[128:], b2, b3(pad), b4(pad)
    # w_mlp_hbm:  (576, 128) HBM  packed MLP weights (copied manually)
    # out_ref:    (B, 1)
    # w_mlp_vmem: (576, 128) VMEM scratch
    # dma_sem:    DMA semaphore, shape (1,)

    # Kick off the MLP-weight DMA immediately; it overlaps with the GRU.
    mlp_cp = pltpu.make_async_copy(w_mlp_hbm, w_mlp_vmem, dma_sem.at[0])
    mlp_cp.start()

    # Hoisted input-side projection for all T timesteps: one MXU call.
    xg = jnp.dot(x_ref[...], w_x_ref[...],
                 preferred_element_type=jnp.float32) + b_x_ref[...]   # (T*B, 384)

    w_h = w_h_ref[...]
    b_hn = b_hn_ref[...]                                              # (1, H)

    h = jnp.zeros((B, H), jnp.float32)
    # Statically unrolled serial recurrence; only h @ W_h is on the chain.
    for t in range(T):
        xg_t = xg[t * B:(t + 1) * B, :]                               # (B, 384)
        hg = jnp.dot(h, w_h, preferred_element_type=jnp.float32)      # (B, 384)
        # One 256-lane sigmoid covers r and z (vreg-aligned slices only).
        rz = jax.nn.sigmoid(xg_t[:, 0:2 * GS] + hg[:, 0:2 * GS])
        r = rz[:, 0:H]
        z = rz[:, GS:GS + H]
        n = jnp.tanh(xg_t[:, 2 * GS:2 * GS + H]
                     + r * (hg[:, 2 * GS:2 * GS + H] + b_hn))
        h = (1.0 - z) * n + z * h

    # MLP head on the final hidden state — wait for the overlapped DMA now.
    mlp_cp.wait()
    W = w_mlp_vmem
    Bm = b_mlp_ref

    # Layer 1: 64 -> 256, computed as two lane-dense 128-wide halves.
    y1a = _leaky_relu(
        jnp.dot(h, W[0:64, :], preferred_element_type=jnp.float32) + Bm[0:1, :])
    y1b = _leaky_relu(
        jnp.dot(h, W[64:128, :], preferred_element_type=jnp.float32) + Bm[1:2, :])
    # Layer 2: 256 -> 128.
    y2 = _leaky_relu(
        jnp.dot(y1a, W[128:256, :], preferred_element_type=jnp.float32)
        + jnp.dot(y1b, W[256:384, :], preferred_element_type=jnp.float32)
        + Bm[2:3, :])
    # Layer 3: 128 -> 64 (output lanes 64:128 are exactly zero by construction).
    y3 = _leaky_relu(
        jnp.dot(y2, W[384:512, :], preferred_element_type=jnp.float32) + Bm[3:4, :])
    # Layer 4: 64 -> 1 (only column 0 of the padded weight block is nonzero).
    y4 = jnp.dot(y3[:, 0:64], W[512:576, :],
                 preferred_element_type=jnp.float32) + Bm[4:5, :]
    out_ref[...] = jax.nn.sigmoid(y4[:, 0:1])                         # (B, 1)


def pack_params(params):
    """Repack raw (math-layout, gate order r,z,n) params into kernel buffers."""
    (w_ih, w_hh, b_ih, b_hh, w1, b1, w2, b2, w3, b3, w4, b4) = params

    # x-side fused weights/biases, gates in 128-lane slots (upper 64 lanes 0).
    w_x = jnp.zeros((I, NG * GS), jnp.float32)
    b_x = jnp.zeros((1, NG * GS), jnp.float32)
    w_h = jnp.zeros((H, NG * GS), jnp.float32)
    for g in range(NG):
        w_x = w_x.at[:, g * GS:g * GS + H].set(w_ih[g])
        w_h = w_h.at[:, g * GS:g * GS + H].set(w_hh[g])
    b_x = b_x.at[:, 0 * GS:0 * GS + H].set(b_ih[0] + b_hh[0])   # r
    b_x = b_x.at[:, 1 * GS:1 * GS + H].set(b_ih[1] + b_hh[1])   # z
    b_x = b_x.at[:, 2 * GS:2 * GS + H].set(b_ih[2])             # n (x side)
    b_hn = b_hh[2]                                              # (1, H)

    # Packed MLP weight slab (exact K, lane width 128).
    w_mlp = jnp.zeros((MLP_ROWS, 128), jnp.float32)
    w_mlp = w_mlp.at[0:64, :].set(w1[:, 0:128])
    w_mlp = w_mlp.at[64:128, :].set(w1[:, 128:256])
    w_mlp = w_mlp.at[128:384, :].set(w2)
    w_mlp = w_mlp.at[384:512, 0:64].set(w3)
    w_mlp = w_mlp.at[512:576, 0:1].set(w4)

    b_mlp = jnp.zeros((8, 128), jnp.float32)
    b_mlp = b_mlp.at[0, :].set(b1[0, 0:128])
    b_mlp = b_mlp.at[1, :].set(b1[0, 128:256])
    b_mlp = b_mlp.at[2, :].set(b2[0])
    b_mlp = b_mlp.at[3, 0:64].set(b3[0])
    b_mlp = b_mlp.at[4, 0:1].set(b4[0])
    return w_x, b_x, w_h, b_hn, w_mlp, b_mlp


def discriminator_forward(x_btI, params):
    """x_btI: (B, T, 64) batch_first, like the PyTorch module. Returns (B, 1)."""
    # Layout-only prep in the wrapper: time-major, flattened to (T*B, I).
    x_flat = jnp.transpose(x_btI, (1, 0, 2)).reshape(T * B, I)
    w_x, b_x, w_h, b_hn, w_mlp, b_mlp = pack_params(params)

    return pl.pallas_call(
        disc_kernel,
        out_shape=jax.ShapeDtypeStruct((B, 1), jnp.float32),
        grid=(1,),
        in_specs=[
            pl.BlockSpec((T * B, I), lambda i: (0, 0)),
            pl.BlockSpec((I, NG * GS), lambda i: (0, 0)),
            pl.BlockSpec((1, NG * GS), lambda i: (0, 0)),
            pl.BlockSpec((H, NG * GS), lambda i: (0, 0)),
            pl.BlockSpec((1, H), lambda i: (0, 0)),
            pl.BlockSpec((8, 128), lambda i: (0, 0)),
            pl.BlockSpec(memory_space=pl.ANY),        # MLP weight slab (manual DMA)
        ],
        out_specs=pl.BlockSpec((B, 1), lambda i: (0, 0)),
        scratch_shapes=[
            pltpu.VMEM((MLP_ROWS, 128), jnp.float32),
            pltpu.SemaphoreType.DMA((1,)),
        ],
        compiler_params=pltpu.CompilerParams(
            dimension_semantics=("arbitrary",)),
    )(x_flat, w_x, b_x, w_h, b_hn, b_mlp, w_mlp)


def init_params(key):
    ks = jax.random.split(key, 12)
    s = 0.1
    w_ih = s * jax.random.normal(ks[0], (3, I, H), jnp.float32)
    w_hh = s * jax.random.normal(ks[1], (3, H, H), jnp.float32)
    b_ih = s * jax.random.normal(ks[2], (3, 1, H), jnp.float32)
    b_hh = s * jax.random.normal(ks[3], (3, 1, H), jnp.float32)
    w1 = s * jax.random.normal(ks[4], (H, 256), jnp.float32)
    b1 = s * jax.random.normal(ks[5], (1, 256), jnp.float32)
    w2 = s * jax.random.normal(ks[6], (256, 128), jnp.float32)
    b2 = s * jax.random.normal(ks[7], (1, 128), jnp.float32)
    w3 = s * jax.random.normal(ks[8], (128, 64), jnp.float32)
    b3 = s * jax.random.normal(ks[9], (1, 64), jnp.float32)
    w4 = s * jax.random.normal(ks[10], (64, 1), jnp.float32)
    b4 = s * jax.random.normal(ks[11], (1, 1), jnp.float32)
    return (w_ih, w_hh, b_ih, b_hh, w1, b1, w2, b2, w3, b3, w4, b4)


def reference_forward(x_btI, params):
    """Pure-JAX reference matching torch.nn.GRU + Sequential semantics."""
    (w_ih, w_hh, b_ih, b_hh, w1, b1, w2, b2, w3, b3, w4, b4) = params
    h = jnp.zeros((B, H), jnp.float32)
    hp = jax.lax.Precision.HIGHEST
    for t in range(T):
        x_t = x_btI[:, t, :]
        r = jax.nn.sigmoid(jnp.dot(x_t, w_ih[0], precision=hp) + b_ih[0]
                           + jnp.dot(h, w_hh[0], precision=hp) + b_hh[0])
        z = jax.nn.sigmoid(jnp.dot(x_t, w_ih[1], precision=hp) + b_ih[1]
                           + jnp.dot(h, w_hh[1], precision=hp) + b_hh[1])
        n = jnp.tanh(jnp.dot(x_t, w_ih[2], precision=hp) + b_ih[2]
                     + r * (jnp.dot(h, w_hh[2], precision=hp) + b_hh[2]))
        h = (1.0 - z) * n + z * h
    y = _leaky_relu(jnp.dot(h, w1, precision=hp) + b1)
    y = _leaky_relu(jnp.dot(y, w2, precision=hp) + b2)
    y = _leaky_relu(jnp.dot(y, w3, precision=hp) + b3)
    y = jax.nn.sigmoid(jnp.dot(y, w4, precision=hp) + b4)
    return y  # (B, 1) — matches out.squeeze(0) on h of shape (1, B, 64)


if __name__ == "__main__":
    key = jax.random.PRNGKey(0)
    kx, kp = jax.random.split(key)
    x = jax.random.normal(kx, (B, T, I), jnp.float32)
    params = init_params(kp)

    out = discriminator_forward(x, params)
    out = jax.block_until_ready(out)

    ref = reference_forward(x, params)
    assert out.shape == (B, 1)
    assert jnp.allclose(out, ref, atol=5e-3, rtol=5e-3), (
        f"max abs diff {jnp.max(jnp.abs(out - ref))}")

    print("KERNEL_OK")
</pallas_src>

<mosaic_0001>
module attributes {stable_mosaic.version = 11 : i64} {
  func.func @disc_kernel(%arg0: i32, %arg1: memref<16x64xf32, #tpu.memory_space<vmem>>, %arg2: memref<64x384xf32, #tpu.memory_space<vmem>>, %arg3: memref<1x384xf32, #tpu.memory_space<vmem>>, %arg4: memref<64x384xf32, #tpu.memory_space<vmem>>, %arg5: memref<1x64xf32, #tpu.memory_space<vmem>>, %arg6: memref<8x128xf32, #tpu.memory_space<vmem>>, %arg7: memref<576x128xf32, #tpu.memory_space<any>>, %arg8: memref<2x1xf32, #tpu.memory_space<vmem>>, %arg9: memref<576x128xf32, #tpu.memory_space<vmem>>, %arg10: memref<1x!tpu.dma_semaphore, #tpu.memory_space<semaphore_mem>>) attributes {dimension_semantics = [#tpu.dimension_semantics<arbitrary>], iteration_bounds = array<i64: 1>, scalar_prefetch = 0 : i64, scratch_operands = 2 : i64, tpu.core_type = #tpu.core_type<tc>, window_params = [{pipeline_mode = #tpu.pipeline_mode<synchronous>, transform_indices = @transform_0, window_bounds = array<i64: 16, 64>}, {pipeline_mode = #tpu.pipeline_mode<synchronous>, transform_indices = @transform_1, window_bounds = array<i64: 64, 384>}, {pipeline_mode = #tpu.pipeline_mode<synchronous>, transform_indices = @transform_2, window_bounds = array<i64: 1, 384>}, {pipeline_mode = #tpu.pipeline_mode<synchronous>, transform_indices = @transform_3, window_bounds = array<i64: 64, 384>}, {pipeline_mode = #tpu.pipeline_mode<synchronous>, transform_indices = @transform_4, window_bounds = array<i64: 1, 64>}, {pipeline_mode = #tpu.pipeline_mode<synchronous>, transform_indices = @transform_5, window_bounds = array<i64: 8, 128>}, {}, {pipeline_mode = #tpu.pipeline_mode<synchronous>, transform_indices = @transform_7, window_bounds = array<i64: 2, 1>}]} {
    %c0_i32 = arith.constant 0 : i32
    %0 = tpu.memref_slice %arg10[%c0_i32] : memref<1x!tpu.dma_semaphore, #tpu.memory_space<semaphore_mem>> -> memref<1x!tpu.dma_semaphore, #tpu.memory_space<semaphore_mem>>
    %1 = tpu.memref_squeeze %0 : memref<1x!tpu.dma_semaphore, #tpu.memory_space<semaphore_mem>> -> memref<!tpu.dma_semaphore, #tpu.memory_space<semaphore_mem>>
    tpu.enqueue_dma source(%arg7 : memref<576x128xf32, #tpu.memory_space<any>>) target(%arg9 : memref<576x128xf32, #tpu.memory_space<vmem>>) target_semaphore(%1 : memref<!tpu.dma_semaphore, #tpu.memory_space<semaphore_mem>>)
    %c0 = arith.constant 0 : index
    %c0_0 = arith.constant 0 : index
    %2 = vector.load %arg1[%c0, %c0_0] : memref<16x64xf32, #tpu.memory_space<vmem>>, vector<16x64xf32>
    %c0_1 = arith.constant 0 : index
    %c0_2 = arith.constant 0 : index
    %3 = vector.load %arg2[%c0_1, %c0_2] : memref<64x384xf32, #tpu.memory_space<vmem>>, vector<64x384xf32>
    %cst = arith.constant dense<0.000000e+00> : vector<16x384xf32>
    %4 = tpu.matmul %2, %3, %cst {dimension_numbers = #tpu.dot_dimension_numbers<[1], [0], [0], [1], [0, 0, 1, 1], [], []>} : vector<16x64xf32>, vector<64x384xf32>, vector<16x384xf32> -> vector<16x384xf32>
    %c0_3 = arith.constant 0 : index
    %c0_4 = arith.constant 0 : index
    %5 = vector.load %arg3[%c0_3, %c0_4] : memref<1x384xf32, #tpu.memory_space<vmem>>, vector<1x384xf32>
    %6 = vector.broadcast %5 : vector<1x384xf32> to vector<16x384xf32>
    %7 = arith.addf %4, %6 : vector<16x384xf32>
    %c0_5 = arith.constant 0 : index
    %c0_6 = arith.constant 0 : index
    %8 = vector.load %arg4[%c0_5, %c0_6] : memref<64x384xf32, #tpu.memory_space<vmem>>, vector<64x384xf32>
    %c0_7 = arith.constant 0 : index
    %c0_8 = arith.constant 0 : index
    %9 = vector.load %arg5[%c0_7, %c0_8] : memref<1x64xf32, #tpu.memory_space<vmem>>, vector<1x64xf32>
    %cst_9 = arith.constant 0.000000e+00 : f32
    %10 = vector.broadcast %cst_9 : f32 to vector<2x64xf32>
    %11 = vector.extract_strided_slice %7 {offsets = [0, 0], sizes = [2, 384], strides = [1, 1]} : vector<16x384xf32> to vector<2x384xf32>
    %cst_10 = arith.constant dense<0.000000e+00> : vector<2x384xf32>
    %12 = tpu.matmul %10, %8, %cst_10 {dimension_numbers = #tpu.dot_dimension_numbers<[1], [0], [0], [1], [0, 0, 1, 1], [], []>} : vector<2x64xf32>, vector<64x384xf32>, vector<2x384xf32> -> vector<2x384xf32>
    %13 = vector.extract_strided_slice %11 {offsets = [0, 0], sizes = [2, 256], strides = [1, 1]} : vector<2x384xf32> to vector<2x256xf32>
    %14 = vector.extract_strided_slice %12 {offsets = [0, 0], sizes = [2, 256], strides = [1, 1]} : vector<2x384xf32> to vector<2x256xf32>
    %15 = arith.addf %13, %14 : vector<2x256xf32>
    %16 = arith.negf %15 : vector<2x256xf32>
    %17 = math.exp %16 : vector<2x256xf32>
    %cst_11 = arith.constant 1.000000e+00 : f32
    %18 = vector.broadcast %cst_11 : f32 to vector<2x256xf32>
    %19 = arith.addf %18, %17 : vector<2x256xf32>
    %20 = arith.divf %18, %19 : vector<2x256xf32>
    %21 = vector.extract_strided_slice %20 {offsets = [0, 0], sizes = [2, 64], strides = [1, 1]} : vector<2x256xf32> to vector<2x64xf32>
    %22 = vector.extract_strided_slice %20 {offsets = [0, 128], sizes = [2, 64], strides = [1, 1]} : vector<2x256xf32> to vector<2x64xf32>
    %23 = vector.extract_strided_slice %11 {offsets = [0, 256], sizes = [2, 64], strides = [1, 1]} : vector<2x384xf32> to vector<2x64xf32>
    %24 = vector.extract_strided_slice %12 {offsets = [0, 256], sizes = [2, 64], strides = [1, 1]} : vector<2x384xf32> to vector<2x64xf32>
    %25 = vector.broadcast %9 : vector<1x64xf32> to vector<2x64xf32>
    %26 = arith.addf %24, %25 : vector<2x64xf32>
    %27 = arith.mulf %21, %26 : vector<2x64xf32>
    %28 = arith.addf %23, %27 : vector<2x64xf32>
    %29 = math.tanh %28 : vector<2x64xf32>
    %cst_12 = arith.constant 1.000000e+00 : f32
    %30 = vector.broadcast %cst_12 : f32 to vector<2x64xf32>
    %31 = arith.subf %30, %22 : vector<2x64xf32>
    %32 = arith.mulf %31, %29 : vector<2x64xf32>
    %33 = arith.mulf %22, %10 : vector<2x64xf32>
    %34 = arith.addf %32, %33 : vector<2x64xf32>
    %35 = vector.extract_strided_slice %7 {offsets = [2, 0], sizes = [2, 384], strides = [1, 1]} : vector<16x384xf32> to vector<2x384xf32>
    %cst_13 = arith.constant dense<0.000000e+00> : vector<2x384xf32>
    %36 = tpu.matmul %34, %8, %cst_13 {dimension_numbers = #tpu.dot_dimension_numbers<[1], [0], [0], [1], [0, 0, 1, 1], [], []>} : vector<2x64xf32>, vector<64x384xf32>, vector<2x384xf32> -> vector<2x384xf32>
    %37 = vector.extract_strided_slice %35 {offsets = [0, 0], sizes = [2, 256], strides = [1, 1]} : vector<2x384xf32> to vector<2x256xf32>
    %38 = vector.extract_strided_slice %36 {offsets = [0, 0], sizes = [2, 256], strides = [1, 1]} : vector<2x384xf32> to vector<2x256xf32>
    %39 = arith.addf %37, %38 : vector<2x256xf32>
    %40 = arith.negf %39 : vector<2x256xf32>
    %41 = math.exp %40 : vector<2x256xf32>
    %cst_14 = arith.constant 1.000000e+00 : f32
    %42 = vector.broadcast %cst_14 : f32 to vector<2x256xf32>
    %43 = arith.addf %42, %41 : vector<2x256xf32>
    %44 = arith.divf %42, %43 : vector<2x256xf32>
    %45 = vector.extract_strided_slice %44 {offsets = [0, 0], sizes = [2, 64], strides = [1, 1]} : vector<2x256xf32> to vector<2x64xf32>
    %46 = vector.extract_strided_slice %44 {offsets = [0, 128], sizes = [2, 64], strides = [1, 1]} : vector<2x256xf32> to vector<2x64xf32>
    %47 = vector.extract_strided_slice %35 {offsets = [0, 256], sizes = [2, 64], strides = [1, 1]} : vector<2x384xf32> to vector<2x64xf32>
    %48 = vector.extract_strided_slice %36 {offsets = [0, 256], sizes = [2, 64], strides = [1, 1]} : vector<2x384xf32> to vector<2x64xf32>
    %49 = vector.broadcast %9 : vector<1x64xf32> to vector<2x64xf32>
    %50 = arith.addf %48, %49 : vector<2x64xf32>
    %51 = arith.mulf %45, %50 : vector<2x64xf32>
    %52 = arith.addf %47, %51 : vector<2x64xf32>
    %53 = math.tanh %52 : vector<2x64xf32>
    %cst_15 = arith.constant 1.000000e+00 : f32
    %54 = vector.broadcast %cst_15 : f32 to vector<2x64xf32>
    %55 = arith.subf %54, %46 : vector<2x64xf32>
    %56 = arith.mulf %55, %53 : vector<2x64xf32>
    %57 = arith.mulf %46, %34 : vector<2x64xf32>
    %58 = arith.addf %56, %57 : vector<2x64xf32>
    %59 = vector.extract_strided_slice %7 {offsets = [4, 0], sizes = [2, 384], strides = [1, 1]} : vector<16x384xf32> to vector<2x384xf32>
    %cst_16 = arith.constant dense<0.000000e+00> : vector<2x384xf32>
    %60 = tpu.matmul %58, %8, %cst_16 {dimension_numbers = #tpu.dot_dimension_numbers<[1], [0], [0], [1], [0, 0, 1, 1], [], []>} : vector<2x64xf32>, vector<64x384xf32>, vector<2x384xf32> -> vector<2x384xf32>
    %61 = vector.extract_strided_slice %59 {offsets = [0, 0], sizes = [2, 256], strides = [1, 1]} : vector<2x384xf32> to vector<2x256xf32>
    %62 = vector.extract_strided_slice %60 {offsets = [0, 0], sizes = [2, 256], strides = [1, 1]} : vector<2x384xf32> to vector<2x256xf32>
    %63 = arith.addf %61, %62 : vector<2x256xf32>
    %64 = arith.negf %63 : vector<2x256xf32>
    %65 = math.exp %64 : vector<2x256xf32>
    %cst_17 = arith.constant 1.000000e+00 : f32
    %66 = vector.broadcast %cst_17 : f32 to vector<2x256xf32>
    %67 = arith.addf %66, %65 : vector<2x256xf32>
    %68 = arith.divf %66, %67 : vector<2x256xf32>
    %69 = vector.extract_strided_slice %68 {offsets = [0, 0], sizes = [2, 64], strides = [1, 1]} : vector<2x256xf32> to vector<2x64xf32>
    %70 = vector.extract_strided_slice %68 {offsets = [0, 128], sizes = [2, 64], strides = [1, 1]} : vector<2x256xf32> to vector<2x64xf32>
    %71 = vector.extract_strided_slice %59 {offsets = [0, 256], sizes = [2, 64], strides = [1, 1]} : vector<2x384xf32> to vector<2x64xf32>
    %72 = vector.extract_strided_slice %60 {offsets = [0, 256], sizes = [2, 64], strides = [1, 1]} : vector<2x384xf32> to vector<2x64xf32>
    %73 = vector.broadcast %9 : vector<1x64xf32> to vector<2x64xf32>
    %74 = arith.addf %72, %73 : vector<2x64xf32>
    %75 = arith.mulf %69, %74 : vector<2x64xf32>
    %76 = arith.addf %71, %75 : vector<2x64xf32>
    %77 = math.tanh %76 : vector<2x64xf32>
    %cst_18 = arith.constant 1.000000e+00 : f32
    %78 = vector.broadcast %cst_18 : f32 to vector<2x64xf32>
    %79 = arith.subf %78, %70 : vector<2x64xf32>
    %80 = arith.mulf %79, %77 : vector<2x64xf32>
    %81 = arith.mulf %70, %58 : vector<2x64xf32>
    %82 = arith.addf %80, %81 : vector<2x64xf32>
    %83 = vector.extract_strided_slice %7 {offsets = [6, 0], sizes = [2, 384], strides = [1, 1]} : vector<16x384xf32> to vector<2x384xf32>
    %cst_19 = arith.constant dense<0.000000e+00> : vector<2x384xf32>
    %84 = tpu.matmul %82, %8, %cst_19 {dimension_numbers = #tpu.dot_dimension_numbers<[1], [0], [0], [1], [0, 0, 1, 1], [], []>} : vector<2x64xf32>, vector<64x384xf32>, vector<2x384xf32> -> vector<2x384xf32>
    %85 = vector.extract_strided_slice %83 {offsets = [0, 0], sizes = [2, 256], strides = [1, 1]} : vector<2x384xf32> to vector<2x256xf32>
    %86 = vector.extract_strided_slice %84 {offsets = [0, 0], sizes = [2, 256], strides = [1, 1]} : vector<2x384xf32> to vector<2x256xf32>
    %87 = arith.addf %85, %86 : vector<2x256xf32>
    %88 = arith.negf %87 : vector<2x256xf32>
    %89 = math.exp %88 : vector<2x256xf32>
    %cst_20 = arith.constant 1.000000e+00 : f32
    %90 = vector.broadcast %cst_20 : f32 to vector<2x256xf32>
    %91 = arith.addf %90, %89 : vector<2x256xf32>
    %92 = arith.divf %90, %91 : vector<2x256xf32>
    %93 = vector.extract_strided_slice %92 {offsets = [0, 0], sizes = [2, 64], strides = [1, 1]} : vector<2x256xf32> to vector<2x64xf32>
    %94 = vector.extract_strided_slice %92 {offsets = [0, 128], sizes = [2, 64], strides = [1, 1]} : vector<2x256xf32> to vector<2x64xf32>
    %95 = vector.extract_strided_slice %83 {offsets = [0, 256], sizes = [2, 64], strides = [1, 1]} : vector<2x384xf32> to vector<2x64xf32>
    %96 = vector.extract_strided_slice %84 {offsets = [0, 256], sizes = [2, 64], strides = [1, 1]} : vector<2x384xf32> to vector<2x64xf32>
    %97 = vector.broadcast %9 : vector<1x64xf32> to vector<2x64xf32>
    %98 = arith.addf %96, %97 : vector<2x64xf32>
    %99 = arith.mulf %93, %98 : vector<2x64xf32>
    %100 = arith.addf %95, %99 : vector<2x64xf32>
    %101 = math.tanh %100 : vector<2x64xf32>
    %cst_21 = arith.constant 1.000000e+00 : f32
    %102 = vector.broadcast %cst_21 : f32 to vector<2x64xf32>
    %103 = arith.subf %102, %94 : vector<2x64xf32>
    %104 = arith.mulf %103, %101 : vector<2x64xf32>
    %105 = arith.mulf %94, %82 : vector<2x64xf32>
    %106 = arith.addf %104, %105 : vector<2x64xf32>
    %107 = vector.extract_strided_slice %7 {offsets = [8, 0], sizes = [2, 384], strides = [1, 1]} : vector<16x384xf32> to vector<2x384xf32>
    %cst_22 = arith.constant dense<0.000000e+00> : vector<2x384xf32>
    %108 = tpu.matmul %106, %8, %cst_22 {dimension_numbers = #tpu.dot_dimension_numbers<[1], [0], [0], [1], [0, 0, 1, 1], [], []>} : vector<2x64xf32>, vector<64x384xf32>, vector<2x384xf32> -> vector<2x384xf32>
    %109 = vector.extract_strided_slice %107 {offsets = [0, 0], sizes = [2, 256], strides = [1, 1]} : vector<2x384xf32> to vector<2x256xf32>
    %110 = vector.extract_strided_slice %108 {offsets = [0, 0], sizes = [2, 256], strides = [1, 1]} : vector<2x384xf32> to vector<2x256xf32>
    %111 = arith.addf %109, %110 : vector<2x256xf32>
    %112 = arith.negf %111 : vector<2x256xf32>
    %113 = math.exp %112 : vector<2x256xf32>
    %cst_23 = arith.constant 1.000000e+00 : f32
    %114 = vector.broadcast %cst_23 : f32 to vector<2x256xf32>
    %115 = arith.addf %114, %113 : vector<2x256xf32>
    %116 = arith.divf %114, %115 : vector<2x256xf32>
    %117 = vector.extract_strided_slice %116 {offsets = [0, 0], sizes = [2, 64], strides = [1, 1]} : vector<2x256xf32> to vector<2x64xf32>
    %118 = vector.extract_strided_slice %116 {offsets = [0, 128], sizes = [2, 64], strides = [1, 1]} : vector<2x256xf32> to vector<2x64xf32>
    %119 = vector.extract_strided_slice %107 {offsets = [0, 256], sizes = [2, 64], strides = [1, 1]} : vector<2x384xf32> to vector<2x64xf32>
    %120 = vector.extract_strided_slice %108 {offsets = [0, 256], sizes = [2, 64], strides = [1, 1]} : vector<2x384xf32> to vector<2x64xf32>
    %121 = vector.broadcast %9 : vector<1x64xf32> to vector<2x64xf32>
    %122 = arith.addf %120, %121 : vector<2x64xf32>
    %123 = arith.mulf %117, %122 : vector<2x64xf32>
    %124 = arith.addf %119, %123 : vector<2x64xf32>
    %125 = math.tanh %124 : vector<2x64xf32>
    %cst_24 = arith.constant 1.000000e+00 : f32
    %126 = vector.broadcast %cst_24 : f32 to vector<2x64xf32>
    %127 = arith.subf %126, %118 : vector<2x64xf32>
    %128 = arith.mulf %127, %125 : vector<2x64xf32>
    %129 = arith.mulf %118, %106 : vector<2x64xf32>
    %130 = arith.addf %128, %129 : vector<2x64xf32>
    %131 = vector.extract_strided_slice %7 {offsets = [10, 0], sizes = [2, 384], strides = [1, 1]} : vector<16x384xf32> to vector<2x384xf32>
    %cst_25 = arith.constant dense<0.000000e+00> : vector<2x384xf32>
    %132 = tpu.matmul %130, %8, %cst_25 {dimension_numbers = #tpu.dot_dimension_numbers<[1], [0], [0], [1], [0, 0, 1, 1], [], []>} : vector<2x64xf32>, vector<64x384xf32>, vector<2x384xf32> -> vector<2x384xf32>
    %133 = vector.extract_strided_slice %131 {offsets = [0, 0], sizes = [2, 256], strides = [1, 1]} : vector<2x384xf32> to vector<2x256xf32>
    %134 = vector.extract_strided_slice %132 {offsets = [0, 0], sizes = [2, 256], strides = [1, 1]} : vector<2x384xf32> to vector<2x256xf32>
    %135 = arith.addf %133, %134 : vector<2x256xf32>
    %136 = arith.negf %135 : vector<2x256xf32>
    %137 = math.exp %136 : vector<2x256xf32>
    %cst_26 = arith.constant 1.000000e+00 : f32
    %138 = vector.broadcast %cst_26 : f32 to vector<2x256xf32>
    %139 = arith.addf %138, %137 : vector<2x256xf32>
    %140 = arith.divf %138, %139 : vector<2x256xf32>
    %141 = vector.extract_strided_slice %140 {offsets = [0, 0], sizes = [2, 64], strides = [1, 1]} : vector<2x256xf32> to vector<2x64xf32>
    %142 = vector.extract_strided_slice %140 {offsets = [0, 128], sizes = [2, 64], strides = [1, 1]} : vector<2x256xf32> to vector<2x64xf32>
    %143 = vector.extract_strided_slice %131 {offsets = [0, 256], sizes = [2, 64], strides = [1, 1]} : vector<2x384xf32> to vector<2x64xf32>
    %144 = vector.extract_strided_slice %132 {offsets = [0, 256], sizes = [2, 64], strides = [1, 1]} : vector<2x384xf32> to vector<2x64xf32>
    %145 = vector.broadcast %9 : vector<1x64xf32> to vector<2x64xf32>
    %146 = arith.addf %144, %145 : vector<2x64xf32>
    %147 = arith.mulf %141, %146 : vector<2x64xf32>
    %148 = arith.addf %143, %147 : vector<2x64xf32>
    %149 = math.tanh %148 : vector<2x64xf32>
    %cst_27 = arith.constant 1.000000e+00 : f32
    %150 = vector.broadcast %cst_27 : f32 to vector<2x64xf32>
    %151 = arith.subf %150, %142 : vector<2x64xf32>
    %152 = arith.mulf %151, %149 : vector<2x64xf32>
    %153 = arith.mulf %142, %130 : vector<2x64xf32>
    %154 = arith.addf %152, %153 : vector<2x64xf32>
    %155 = vector.extract_strided_slice %7 {offsets = [12, 0], sizes = [2, 384], strides = [1, 1]} : vector<16x384xf32> to vector<2x384xf32>
    %cst_28 = arith.constant dense<0.000000e+00> : vector<2x384xf32>
    %156 = tpu.matmul %154, %8, %cst_28 {dimension_numbers = #tpu.dot_dimension_numbers<[1], [0], [0], [1], [0, 0, 1, 1], [], []>} : vector<2x64xf32>, vector<64x384xf32>, vector<2x384xf32> -> vector<2x384xf32>
    %157 = vector.extract_strided_slice %155 {offsets = [0, 0], sizes = [2, 256], strides = [1, 1]} : vector<2x384xf32> to vector<2x256xf32>
    %158 = vector.extract_strided_slice %156 {offsets = [0, 0], sizes = [2, 256], strides = [1, 1]} : vector<2x384xf32> to vector<2x256xf32>
    %159 = arith.addf %157, %158 : vector<2x256xf32>
    %160 = arith.negf %159 : vector<2x256xf32>
    %161 = math.exp %160 : vector<2x256xf32>
    %cst_29 = arith.constant 1.000000e+00 : f32
    %162 = vector.broadcast %cst_29 : f32 to vector<2x256xf32>
    %163 = arith.addf %162, %161 : vector<2x256xf32>
    %164 = arith.divf %162, %163 : vector<2x256xf32>
    %165 = vector.extract_strided_slice %164 {offsets = [0, 0], sizes = [2, 64], strides = [1, 1]} : vector<2x256xf32> to vector<2x64xf32>
    %166 = vector.extract_strided_slice %164 {offsets = [0, 128], sizes = [2, 64], strides = [1, 1]} : vector<2x256xf32> to vector<2x64xf32>
    %167 = vector.extract_strided_slice %155 {offsets = [0, 256], sizes = [2, 64], strides = [1, 1]} : vector<2x384xf32> to vector<2x64xf32>
    %168 = vector.extract_strided_slice %156 {offsets = [0, 256], sizes = [2, 64], strides = [1, 1]} : vector<2x384xf32> to vector<2x64xf32>
    %169 = vector.broadcast %9 : vector<1x64xf32> to vector<2x64xf32>
    %170 = arith.addf %168, %169 : vector<2x64xf32>
    %171 = arith.mulf %165, %170 : vector<2x64xf32>
    %172 = arith.addf %167, %171 : vector<2x64xf32>
    %173 = math.tanh %172 : vector<2x64xf32>
    %cst_30 = arith.constant 1.000000e+00 : f32
    %174 = vector.broadcast %cst_30 : f32 to vector<2x64xf32>
    %175 = arith.subf %174, %166 : vector<2x64xf32>
    %176 = arith.mulf %175, %173 : vector<2x64xf32>
    %177 = arith.mulf %166, %154 : vector<2x64xf32>
    %178 = arith.addf %176, %177 : vector<2x64xf32>
    %179 = vector.extract_strided_slice %7 {offsets = [14, 0], sizes = [2, 384], strides = [1, 1]} : vector<16x384xf32> to vector<2x384xf32>
    %cst_31 = arith.constant dense<0.000000e+00> : vector<2x384xf32>
    %180 = tpu.matmul %178, %8, %cst_31 {dimension_numbers = #tpu.dot_dimension_numbers<[1], [0], [0], [1], [0, 0, 1, 1], [], []>} : vector<2x64xf32>, vector<64x384xf32>, vector<2x384xf32> -> vector<2x384xf32>
    %181 = vector.extract_strided_slice %179 {offsets = [0, 0], sizes = [2, 256], strides = [1, 1]} : vector<2x384xf32> to vector<2x256xf32>
    %182 = vector.extract_strided_slice %180 {offsets = [0, 0], sizes = [2, 256], strides = [1, 1]} : vector<2x384xf32> to vector<2x256xf32>
    %183 = arith.addf %181, %182 : vector<2x256xf32>
    %184 = arith.negf %183 : vector<2x256xf32>
    %185 = math.exp %184 : vector<2x256xf32>
    %cst_32 = arith.constant 1.000000e+00 : f32
    %186 = vector.broadcast %cst_32 : f32 to vector<2x256xf32>
    %187 = arith.addf %186, %185 : vector<2x256xf32>
    %188 = arith.divf %186, %187 : vector<2x256xf32>
    %189 = vector.extract_strided_slice %188 {offsets = [0, 0], sizes = [2, 64], strides = [1, 1]} : vector<2x256xf32> to vector<2x64xf32>
    %190 = vector.extract_strided_slice %188 {offsets = [0, 128], sizes = [2, 64], strides = [1, 1]} : vector<2x256xf32> to vector<2x64xf32>
    %191 = vector.extract_strided_slice %179 {offsets = [0, 256], sizes = [2, 64], strides = [1, 1]} : vector<2x384xf32> to vector<2x64xf32>
    %192 = vector.extract_strided_slice %180 {offsets = [0, 256], sizes = [2, 64], strides = [1, 1]} : vector<2x384xf32> to vector<2x64xf32>
    %193 = vector.broadcast %9 : vector<1x64xf32> to vector<2x64xf32>
    %194 = arith.addf %192, %193 : vector<2x64xf32>
    %195 = arith.mulf %189, %194 : vector<2x64xf32>
    %196 = arith.addf %191, %195 : vector<2x64xf32>
    %197 = math.tanh %196 : vector<2x64xf32>
    %cst_33 = arith.constant 1.000000e+00 : f32
    %198 = vector.broadcast %cst_33 : f32 to vector<2x64xf32>
    %199 = arith.subf %198, %190 : vector<2x64xf32>
    %200 = arith.mulf %199, %197 : vector<2x64xf32>
    %201 = arith.mulf %190, %178 : vector<2x64xf32>
    %202 = arith.addf %200, %201 : vector<2x64xf32>
    %c0_i32_34 = arith.constant 0 : i32
    %203 = tpu.memref_slice %arg10[%c0_i32_34] : memref<1x!tpu.dma_semaphore, #tpu.memory_space<semaphore_mem>> -> memref<1x!tpu.dma_semaphore, #tpu.memory_space<semaphore_mem>>
    %204 = tpu.memref_squeeze %203 : memref<1x!tpu.dma_semaphore, #tpu.memory_space<semaphore_mem>> -> memref<!tpu.dma_semaphore, #tpu.memory_space<semaphore_mem>>
    tpu.wait_dma2 semaphore(%204 : memref<!tpu.dma_semaphore, #tpu.memory_space<semaphore_mem>>) src(%arg7 : memref<576x128xf32, #tpu.memory_space<any>>) dst(%arg9 : memref<576x128xf32, #tpu.memory_space<vmem>>)
    %c0_35 = arith.constant 0 : index
    %c0_36 = arith.constant 0 : index
    %205 = vector.load %arg9[%c0_35, %c0_36] : memref<576x128xf32, #tpu.memory_space<vmem>>, vector<64x128xf32>
    %cst_37 = arith.constant dense<0.000000e+00> : vector<2x128xf32>
    %206 = tpu.matmul %202, %205, %cst_37 {dimension_numbers = #tpu.dot_dimension_numbers<[1], [0], [0], [1], [0, 0, 1, 1], [], []>} : vector<2x64xf32>, vector<64x128xf32>, vector<2x128xf32> -> vector<2x128xf32>
    %c0_38 = arith.constant 0 : index
    %c0_39 = arith.constant 0 : index
    %207 = vector.load %arg6[%c0_38, %c0_39] : memref<8x128xf32, #tpu.memory_space<vmem>>, vector<1x128xf32>
    %208 = vector.broadcast %207 : vector<1x128xf32> to vector<2x128xf32>
    %209 = arith.addf %206, %208 : vector<2x128xf32>
    %cst_40 = arith.constant 0.000000e+00 : f32
    %210 = vector.broadcast %cst_40 : f32 to vector<2x128xf32>
    %211 = arith.cmpf ogt, %209, %210 : vector<2x128xf32>
    %cst_41 = arith.constant 0.00999999977 : f32
    %212 = vector.broadcast %cst_41 : f32 to vector<2x128xf32>
    %213 = arith.mulf %212, %209 : vector<2x128xf32>
    %214 = arith.select %211, %209, %213 : vector<2x128xi1>, vector<2x128xf32>
    %c64 = arith.constant 64 : index
    %c0_42 = arith.constant 0 : index
    %215 = vector.load %arg9[%c64, %c0_42] : memref<576x128xf32, #tpu.memory_space<vmem>>, vector<64x128xf32>
    %cst_43 = arith.constant dense<0.000000e+00> : vector<2x128xf32>
    %216 = tpu.matmul %202, %215, %cst_43 {dimension_numbers = #tpu.dot_dimension_numbers<[1], [0], [0], [1], [0, 0, 1, 1], [], []>} : vector<2x64xf32>, vector<64x128xf32>, vector<2x128xf32> -> vector<2x128xf32>
    %c1 = arith.constant 1 : index
    %c0_44 = arith.constant 0 : index
    %217 = vector.load %arg6[%c1, %c0_44] : memref<8x128xf32, #tpu.memory_space<vmem>>, vector<1x128xf32>
    %218 = vector.broadcast %217 : vector<1x128xf32> to vector<2x128xf32>
    %219 = arith.addf %216, %218 : vector<2x128xf32>
    %cst_45 = arith.constant 0.000000e+00 : f32
    %220 = vector.broadcast %cst_45 : f32 to vector<2x128xf32>
    %221 = arith.cmpf ogt, %219, %220 : vector<2x128xf32>
    %cst_46 = arith.constant 0.00999999977 : f32
    %222 = vector.broadcast %cst_46 : f32 to vector<2x128xf32>
    %223 = arith.mulf %222, %219 : vector<2x128xf32>
    %224 = arith.select %221, %219, %223 : vector<2x128xi1>, vector<2x128xf32>
    %c128 = arith.constant 128 : index
    %c0_47 = arith.constant 0 : index
    %225 = vector.load %arg9[%c128, %c0_47] : memref<576x128xf32, #tpu.memory_space<vmem>>, vector<128x128xf32>
    %cst_48 = arith.constant dense<0.000000e+00> : vector<2x128xf32>
    %226 = tpu.matmul %214, %225, %cst_48 {dimension_numbers = #tpu.dot_dimension_numbers<[1], [0], [0], [1], [0, 0, 1, 1], [], []>} : vector<2x128xf32>, vector<128x128xf32>, vector<2x128xf32> -> vector<2x128xf32>
    %c256 = arith.constant 256 : index
    %c0_49 = arith.constant 0 : index
    %227 = vector.load %arg9[%c256, %c0_49] : memref<576x128xf32, #tpu.memory_space<vmem>>, vector<128x128xf32>
    %cst_50 = arith.constant dense<0.000000e+00> : vector<2x128xf32>
    %228 = tpu.matmul %224, %227, %cst_50 {dimension_numbers = #tpu.dot_dimension_numbers<[1], [0], [0], [1], [0, 0, 1, 1], [], []>} : vector<2x128xf32>, vector<128x128xf32>, vector<2x128xf32> -> vector<2x128xf32>
    %229 = arith.addf %226, %228 : vector<2x128xf32>
    %c2 = arith.constant 2 : index
    %c0_51 = arith.constant 0 : index
    %230 = vector.load %arg6[%c2, %c0_51] : memref<8x128xf32, #tpu.memory_space<vmem>>, vector<1x128xf32>
    %231 = vector.broadcast %230 : vector<1x128xf32> to vector<2x128xf32>
    %232 = arith.addf %229, %231 : vector<2x128xf32>
    %cst_52 = arith.constant 0.000000e+00 : f32
    %233 = vector.broadcast %cst_52 : f32 to vector<2x128xf32>
    %234 = arith.cmpf ogt, %232, %233 : vector<2x128xf32>
    %cst_53 = arith.constant 0.00999999977 : f32
    %235 = vector.broadcast %cst_53 : f32 to vector<2x128xf32>
    %236 = arith.mulf %235, %232 : vector<2x128xf32>
    %237 = arith.select %234, %232, %236 : vector<2x128xi1>, vector<2x128xf32>
    %c384 = arith.constant 384 : index
    %c0_54 = arith.constant 0 : index
    %238 = vector.load %arg9[%c384, %c0_54] : memref<576x128xf32, #tpu.memory_space<vmem>>, vector<128x128xf32>
    %cst_55 = arith.constant dense<0.000000e+00> : vector<2x128xf32>
    %239 = tpu.matmul %237, %238, %cst_55 {dimension_numbers = #tpu.dot_dimension_numbers<[1], [0], [0], [1], [0, 0, 1, 1], [], []>} : vector<2x128xf32>, vector<128x128xf32>, vector<2x128xf32> -> vector<2x128xf32>
    %c3 = arith.constant 3 : index
    %c0_56 = arith.constant 0 : index
    %240 = vector.load %arg6[%c3, %c0_56] : memref<8x128xf32, #tpu.memory_space<vmem>>, vector<1x128xf32>
    %241 = vector.broadcast %240 : vector<1x128xf32> to vector<2x128xf32>
    %242 = arith.addf %239, %241 : vector<2x128xf32>
    %cst_57 = arith.constant 0.000000e+00 : f32
    %243 = vector.broadcast %cst_57 : f32 to vector<2x128xf32>
    %244 = arith.cmpf ogt, %242, %243 : vector<2x128xf32>
    %cst_58 = arith.constant 0.00999999977 : f32
    %245 = vector.broadcast %cst_58 : f32 to vector<2x128xf32>
    %246 = arith.mulf %245, %242 : vector<2x128xf32>
    %247 = arith.select %244, %242, %246 : vector<2x128xi1>, vector<2x128xf32>
    %248 = vector.extract_strided_slice %247 {offsets = [0, 0], sizes = [2, 64], strides = [1, 1]} : vector<2x128xf32> to vector<2x64xf32>
    %c512 = arith.constant 512 : index
    %c0_59 = arith.constant 0 : index
    %249 = vector.load %arg9[%c512, %c0_59] : memref<576x128xf32, #tpu.memory_space<vmem>>, vector<64x128xf32>
    %cst_60 = arith.constant dense<0.000000e+00> : vector<2x128xf32>
    %250 = tpu.matmul %248, %249, %cst_60 {dimension_numbers = #tpu.dot_dimension_numbers<[1], [0], [0], [1], [0, 0, 1, 1], [], []>} : vector<2x64xf32>, vector<64x128xf32>, vector<2x128xf32> -> vector<2x128xf32>
    %c4 = arith.constant 4 : index
    %c0_61 = arith.constant 0 : index
    %251 = vector.load %arg6[%c4, %c0_61] : memref<8x128xf32, #tpu.memory_space<vmem>>, vector<1x128xf32>
    %252 = vector.broadcast %251 : vector<1x128xf32> to vector<2x128xf32>
    %253 = arith.addf %250, %252 : vector<2x128xf32>
    %254 = vector.extract_strided_slice %253 {offsets = [0, 0], sizes = [2, 1], strides = [1, 1]} : vector<2x128xf32> to vector<2x1xf32>
    %255 = arith.negf %254 : vector<2x1xf32>
    %256 = math.exp %255 : vector<2x1xf32>
    %cst_62 = arith.constant 1.000000e+00 : f32
    %257 = vector.broadcast %cst_62 : f32 to vector<2x1xf32>
    %258 = arith.addf %257, %256 : vector<2x1xf32>
    %259 = arith.divf %257, %258 : vector<2x1xf32>
    %c0_63 = arith.constant 0 : index
    %c0_64 = arith.constant 0 : index
    %260 = vector.load %arg8[%c0_63, %c0_64] : memref<2x1xf32, #tpu.memory_space<vmem>>, vector<2x1xf32>
    tpu.vector_store %arg8[%c0_63, %c0_64], %259 {strides = array<i32>} : memref<2x1xf32, #tpu.memory_space<vmem>>, vector<2x1xf32>,
    return
  }
  func.func @transform_0(%arg0: i32) -> (i32, i32) {
    %c0_i32 = arith.constant 0 : i32
    %c0_i32_0 = arith.constant 0 : i32
    %c0_i32_1 = arith.constant 0 : i32
    return %c0_i32, %c0_i32_0 : i32, i32
  }
  func.func @transform_1(%arg0: i32) -> (i32, i32) {
    %c0_i32 = arith.constant 0 : i32
    %c0_i32_0 = arith.constant 0 : i32
    %c0_i32_1 = arith.constant 0 : i32
    return %c0_i32, %c0_i32_0 : i32, i32
  }
  func.func @transform_2(%arg0: i32) -> (i32, i32) {
    %c0_i32 = arith.constant 0 : i32
    %c0_i32_0 = arith.constant 0 : i32
    %c0_i32_1 = arith.constant 0 : i32
    return %c0_i32, %c0_i32_0 : i32, i32
  }
  func.func @transform_3(%arg0: i32) -> (i32, i32) {
    %c0_i32 = arith.constant 0 : i32
    %c0_i32_0 = arith.constant 0 : i32
    %c0_i32_1 = arith.constant 0 : i32
    return %c0_i32, %c0_i32_0 : i32, i32
  }
  func.func @transform_4(%arg0: i32) -> (i32, i32) {
    %c0_i32 = arith.constant 0 : i32
    %c0_i32_0 = arith.constant 0 : i32
    %c0_i32_1 = arith.constant 0 : i32
    return %c0_i32, %c0_i32_0 : i32, i32
  }
  func.func @transform_5(%arg0: i32) -> (i32, i32) {
    %c0_i32 = arith.constant 0 : i32
    %c0_i32_0 = arith.constant 0 : i32
    %c0_i32_1 = arith.constant 0 : i32
    return %c0_i32, %c0_i32_0 : i32, i32
  }
  func.func @transform_7(%arg0: i32) -> (i32, i32) {
    %c0_i32 = arith.constant 0 : i32
    %c0_i32_0 = arith.constant 0 : i32
    %c0_i32_1 = arith.constant 0 : i32
    return %c0_i32, %c0_i32_0 : i32, i32
  }
}

</mosaic_0001>

<llo_original>
// kernel: tpu_custom_call.1
$region0: #{tpu_custom_call.1}
  #allocation0 [shape = 'u32[]', space=smem, size = 0x4, offset = 0x4, fixed_abs, tag = 'smem constant byte address 0x4 - core index']
  #allocation1 [shape = 'u32[144,128]{1,0:T(1,128)}', space=vmem, size = 0x12000, scoped, tag = 'internal scratch']
  #allocation2 [shape = 'f32[576,128]{1,0:T(8,128)}', space=vmem, size = 0x48000, scoped, tag = 'scratch operand']
  #allocation3 [shape = 's32[1]{0}', space=sflag, size = 0x4, scoped, tag = 'scratch operand']
  #allocation9 [shape = 's32[]', space=sflag, size = 0x4, offset = 0, fixed_abs, tag = 'sflag constant byte address 0x0 - dummy sync flag']
  #allocation10 [shape = 's32[]', space=sflag, size = 0x4, offset = 0, fixed_abs, tag = 'sflag constant byte address 0x0 - dummy sync flag']
  #allocation11 [shape = 'u32[]', space=smem, size = 0x4, offset = 0x44, fixed_abs, tag = 'smem constant byte address 0x44 - assertion arg 0']
  #allocation12 [shape = 'u32[]', space=smem, size = 0x4, offset = 0x48, fixed_abs, tag = 'smem constant byte address 0x48 - assertion arg 1']
  %s0 = inlined_call_operand.hbm [shape: f32[16,64], index: 0, kind: input, shape index: {}]
  %s1 = inlined_call_operand.hbm [shape: f32[64,384], index: 1, kind: input, shape index: {}]
  %s2 = inlined_call_operand.vmem [shape: f32[1,384], index: 2, kind: input, shape index: {}]
  %s3 = inlined_call_operand.hbm [shape: f32[64,384], index: 3, kind: input, shape index: {}]
  %s4 = inlined_call_operand.vmem [shape: f32[1,64], index: 4, kind: input, shape index: {}]
  %s5 = inlined_call_operand.vmem [shape: f32[8,128], index: 5, kind: input, shape index: {}]
  %s6 = inlined_call_operand.hbm [shape: f32[576,128], index: 6, kind: input, shape index: {}]
  %s7 = inlined_call_operand.vmem [shape: f32[2,1], index: 7, kind: output, shape index: {}]
  %s8 = sld [smem:[#allocation0]]
  $region50: #{tpu_custom_call.1} parent=0
    _
  %s10 = ssub.s32 1, %s8
  %s11 = scalar_select 0, %s10, %s8
  $region1: #{tpu_custom_call.1} parent=0
    #allocation4 [shape = 'u8[8192]{0}', space=vmem, size = 0x2000, scoped, tag = 'input window, operand 0, single buffered']
    #allocation5 [shape = 's32[1]{0}', space=sflag, size = 0x4, scoped, tag = 'scoped memory for tpu_custom_call.1']
    #allocation6 [shape = 'u8[98304]{0}', space=vmem, size = 0x18000, scoped, tag = 'input window, operand 1, single buffered']
    #allocation7 [shape = 's32[1]{0}', space=sflag, size = 0x4, scoped, tag = 'scoped memory for tpu_custom_call.1']
    #allocation8 [shape = 'u8[98304]{0}', space=vmem, size = 0x18000, scoped, tag = 'input window, operand 3, single buffered']
    %12 = vsyncpa [#allocation5], 0
    %13 = vsyncpa [#allocation7], 0
    // Predicated region
    $region2: #{tpu_custom_call.1} parent=1 // pred_check
      _
    $region3: #{tpu_custom_call.1} parent=1 // pred_check_branch
      %15 = sbr.rel (0) target = $region5
    $region4: #{tpu_custom_call.1} parent=1 // pred_region
      %s17 = ssub.s32 256, 256
      %18 = vsyncadd [#allocation5], %s17
      %s19 = sshll.u32 [#allocation4], 4
      %s20 = int_to_ptr.vmem [resolvable:$true] %s19
      %25 = dma.hbm_to_vmem [thread:$0]  %s0, 256, %s20, [#allocation5], 128, 128, 8
    $region5: #{tpu_custom_call.1} parent=1 // pred_fallthru
      _
    // Predicated region
    $region6: #{tpu_custom_call.1} parent=1 // pred_check
      _
    $region7: #{tpu_custom_call.1} parent=1 // pred_check_branch
      %27 = sbr.rel (0) target = $region9
    $region8: #{tpu_custom_call.1} parent=1 // pred_region
      %s29 = ssub.s32 3072, 3072
      %30 = vsyncadd [#allocation7], %s29
      %s31 = sshll.u32 [#allocation6], 4
      %s32 = int_to_ptr.vmem [resolvable:$true] %s31
      %37 = dma.hbm_to_vmem [thread:$0]  %s1, 3072, %s32, [#allocation7], 384, 384, 24
    $region9: #{tpu_custom_call.1} parent=1 // pred_fallthru
      _
    // Predicated region
    $region10: #{tpu_custom_call.1} parent=1 // pred_check
      _
    $region11: #{tpu_custom_call.1} parent=1 // pred_check_branch
      %39 = sbr.rel (0) target = $region13
    $region12: #{tpu_custom_call.1} parent=1 // pred_region
      _
    $region13: #{tpu_custom_call.1} parent=1 // pred_fallthru
      _
    // Predicated region
    $region14: #{tpu_custom_call.1} parent=1 // pred_check
      _
    $region15: #{tpu_custom_call.1} parent=1 // pred_check_branch
      %41 = sbr.rel (0) target = $region17
    $region16: #{tpu_custom_call.1} parent=1 // pred_region
      %s43 = ssub.s32 3072, 3072
      %44 = vsyncadd [#allocation7], %s43
      %s45 = sshll.u32 [#allocation8], 4
      %s46 = int_to_ptr.vmem [resolvable:$true] %s45
      %51 = dma.hbm_to_vmem [thread:$0]  %s3, 3072, %s46, [#allocation7], 384, 384, 24
    $region17: #{tpu_custom_call.1} parent=1 // pred_fallthru
      _
    // Predicated region
    $region18: #{tpu_custom_call.1} parent=1 // pred_check
      _
    $region19: #{tpu_custom_call.1} parent=1 // pred_check_branch
      %53 = sbr.rel (0) target = $region21
    $region20: #{tpu_custom_call.1} parent=1 // pred_region
      _
    $region21: #{tpu_custom_call.1} parent=1 // pred_fallthru
      _
    // Predicated region
    $region22: #{tpu_custom_call.1} parent=1 // pred_check
      _
    $region23: #{tpu_custom_call.1} parent=1 // pred_check_branch
      %55 = sbr.rel (0) target = $region25
    $region24: #{tpu_custom_call.1} parent=1 // pred_region
      _
    $region25: #{tpu_custom_call.1} parent=1 // pred_fallthru
      _
    // Predicated region
    $region26: #{tpu_custom_call.1} parent=1 // pred_check
      _
    $region27: #{tpu_custom_call.1} parent=1 // pred_check_branch
      %57 = sbr.rel (0) target = $region29
    $region28: #{tpu_custom_call.1} parent=1 // pred_region
      %58 = dma.done [#allocation5], 256
    $region29: #{tpu_custom_call.1} parent=1 // pred_fallthru
      _
    // Predicated region
    $region30: #{tpu_custom_call.1} parent=1 // pred_check
      _
    $region31: #{tpu_custom_call.1} parent=1 // pred_check_branch
      %60 = sbr.rel (0) target = $region33
    $region32: #{tpu_custom_call.1} parent=1 // pred_region
      %61 = dma.done [#allocation7], 3072
    $region33: #{tpu_custom_call.1} parent=1 // pred_fallthru
      _
    // Predicated region
    $region34: #{tpu_custom_call.1} parent=1 // pred_check
      _
    $region35: #{tpu_custom_call.1} parent=1 // pred_check_branch
      %63 = sbr.rel (0) target = $region37
    $region36: #{tpu_custom_call.1} parent=1 // pred_region
      %64 = dma.done [#allocation7], 3072
    $region37: #{tpu_custom_call.1} parent=1 // pred_fallthru
      _
    // Predicated region
    $region38: #{tpu_custom_call.1} parent=1 // pred_check
      _
    $region39: #{tpu_custom_call.1} parent=1 // pred_check_branch
      %66 = sbr.rel target = $region41
    $region40: #{tpu_custom_call.1} parent=1 // pred_region
      %67 = sst [smem:[#allocation11]] [#allocation10]
      %68 = sst [smem:[#allocation12]] [#allocation9]
    $region41: #{tpu_custom_call.1} parent=1 // pred_fallthru
      _
    %70 = shalt.err (0)
    %s72 = sshll.u32 [#allocation2], 4
    %s73 = int_to_ptr.vmem [resolvable:$true] %s72
    %75 = dma.hbm_to_vmem [thread:$0]  %s6, 9216, %s73, [#allocation3]
    %v76 = vld [vmem:[#allocation4] sm:$0xff]
    %v77 = vld [vmem:[#allocation4 + $0x8] sm:$0xff]
    %v78 = vld [vmem:[#allocation6] sm:$0xff]
    %v79 = vld [vmem:[#allocation6 + $0x8] sm:$0xff]
    %v80 = vld [vmem:[#allocation6 + $0x10] sm:$0xff]
    %v81 = vld [vmem:[#allocation6 + $0x18] sm:$0xff]
    %v82 = vld [vmem:[#allocation6 + $0x20] sm:$0xff]
    %v83 = vld [vmem:[#allocation6 + $0x28] sm:$0xff]
    %v84 = vld [vmem:[#allocation6 + $0x30] sm:$0xff]
    %v85 = vld [vmem:[#allocation6 + $0x38] sm:$0xff]
    %v86 = vld [vmem:[#allocation6 + $0x40] sm:$0xff]
    %v87 = vld [vmem:[#allocation6 + $0x48] sm:$0xff]
    %v88 = vld [vmem:[#allocation6 + $0x50] sm:$0xff]
    %v89 = vld [vmem:[#allocation6 + $0x58] sm:$0xff]
    %v90 = vld [vmem:[#allocation6 + $0x60] sm:$0xff]
    %v91 = vld [vmem:[#allocation6 + $0x68] sm:$0xff]
    %v92 = vld [vmem:[#allocation6 + $0x70] sm:$0xff]
    %v93 = vld [vmem:[#allocation6 + $0x78] sm:$0xff]
    %v94 = vld [vmem:[#allocation6 + $0x80] sm:$0xff]
    %v95 = vld [vmem:[#allocation6 + $0x88] sm:$0xff]
    %v96 = vld [vmem:[#allocation6 + $0x90] sm:$0xff]
    %v97 = vld [vmem:[#allocation6 + $0x98] sm:$0xff]
    %v98 = vld [vmem:[#allocation6 + $0xa0] sm:$0xff]
    %v99 = vld [vmem:[#allocation6 + $0xa8] sm:$0xff]
    %v100 = vld [vmem:[#allocation6 + $0xb0] sm:$0xff]
    %v101 = vld [vmem:[#allocation6 + $0xb8] sm:$0xff]
    %v102 = vld [vmem:[%s2] sm:$0x7]
    %v104 = vlaneseq
    %v105 = vshrl.u32 %v104, 7
    %v106 = vsub.s32 0, %v105
    %v107 = vrot.slane %v102, %v106
    %v108 = vlaneseq
    %v109 = vshrl.u32 %v108, 7
    %v110 = vsub.s32 1, %v109
    %v111 = vrot.slane %v102, %v110
    %v112 = vlaneseq
    %v113 = vshrl.u32 %v112, 7
    %v114 = vsub.s32 2, %v113
    %v115 = vrot.slane %v102, %v114
    %vm119 = vcmask 523264
    %v121 = vsel %vm119, %v76, 0
    %v124 = vsel %vm119, %v77, 0
    %126 = vmatprep.subr.mxu0 %v79
    %127 = vmatpush1.msra.mxu0 %v78
    %128 = vmatprep.subr.mxu0 %v82
    %129 = vmatpush1.msra.mxu0 %v81
    %130 = vmatprep.subr.mxu0 %v85
    %131 = vmatpush1.msra.mxu0 %v84
    %132 = vmatprep.subr.mxu0 %v88
    %133 = vmatpush1.msra.mxu0 %v87
    %134 = vmatprep.subr.mxu0 %v91
    %135 = vmatpush1.msra.mxu0 %v90
    %136 = vmatprep.subr.mxu0 %v94
    %137 = vmatpush1.msra.mxu0 %v93
    %138 = vmatprep.subr.mxu0 %v97
    %139 = vmatpush1.msra.mxu0 %v96
    %140 = vmatprep.subr.mxu0 %v100
    %141 = vmatpush1.msra.mxu0 %v99
    %142 = vmatprep.subr.mxu0 0.0
    %143 = vmatpush1.msra.mxu0 0.0
    %144 = vmatprep.subr.mxu0 0.0
    %145 = vmatpush1.msra.mxu0 0.0
    %146 = vmatprep.subr.mxu0 0.0
    %147 = vmatpush1.msra.mxu0 0.0
    %148 = vmatprep.subr.mxu0 0.0
    %149 = vmatpush1.msra.mxu0 0.0
    %150 = vmatprep.subr.mxu0 0.0
    %151 = vmatpush1.msra.mxu0 0.0
    %152 = vmatprep.subr.mxu0 0.0
    %153 = vmatpush1.msra.mxu0 0.0
    %154 = vmatprep.subr.mxu0 0.0
    %155 = vmatpush1.msra.mxu0 0.0
    %156 = vmatprep.subr.mxu0 0.0
    %157 = vmatpush1.msra.mxu0 0.0
    %158 = vmatprep.subr.mxu0 0.0
    %159 = vmatpush1.msra.mxu0 0.0
    %160 = vmatprep.subr.mxu0 0.0
    %161 = vmatpush1.msra.mxu0 0.0
    %162 = vmatprep.subr.mxu0 0.0
    %163 = vmatpush1.msra.mxu0 0.0
    %164 = vmatprep.subr.mxu0 0.0
    %165 = vmatpush1.msra.mxu0 0.0
    %166 = vmatprep.subr.mxu0 0.0
    %167 = vmatpush1.msra.mxu0 0.0
    %168 = vmatprep.subr.mxu0 0.0
    %169 = vmatpush1.msra.mxu0 0.0
    %170 = vmatprep.subr.mxu0 0.0
    %171 = vmatpush1.msra.mxu0 0.0
    %172 = vmatprep.subr.mxu0 0.0
    %173 = vmatpush1.msra.mxu0 0.0
    %174 = vmatprep.subr.mxu0 0.0
    %175 = vmatpush1.msra.mxu0 0.0
    %176 = vmatprep.subr.mxu0 0.0
    %177 = vmatpush1.msra.mxu0 0.0
    %178 = vmatprep.subr.mxu0 0.0
    %179 = vmatpush1.msra.mxu0 0.0
    %180 = vmatprep.subr.mxu0 0.0
    %181 = vmatpush1.msra.mxu0 0.0
    %182 = vmatprep.subr.mxu0 0.0
    %183 = vmatpush1.msra.mxu0 0.0
    %184 = vmatprep.subr.mxu0 0.0
    %185 = vmatpush1.msra.mxu0 0.0
    %186 = vmatprep.subr.mxu0 0.0
    %187 = vmatpush1.msra.mxu0 0.0
    %188 = vmatprep.subr.mxu0 0.0
    %189 = vmatpush1.msra.mxu0 0.0
    %190 = vmatprep.mubr.f32.mxu0 0.0
    %191 = vmatmul.mubr.f32.gmra.mrb[0].mxu0 %v121
    %v192 = vpop.f32.mrb[0].mxu0
    %v193 = vadd.f32 %v107, %v192
    %v194 = vpop.f32.mrb[0].mxu0
    %v195 = vadd.f32 %v111, %v194
    %196 = vmatprep.mubr.f32.mxu0 0.0
    %197 = vmatmul.mubr.f32.gmra.mrb[0].mxu0 %v124
    %v198 = vpop.f32.mrb[0].mxu0
    %v199 = vadd.f32 %v107, %v198
    %v200 = vpop.f32.mrb[0].mxu0
    %v201 = vadd.f32 %v111, %v200
    %202 = vdwg.mxu0
    %203 = vmatprep.subr.mxu0 0.0
    %204 = vmatpush1.msra.mxu0 %v80
    %205 = vmatprep.subr.mxu0 0.0
    %206 = vmatpush1.msra.mxu0 %v83
    %207 = vmatprep.subr.mxu0 0.0
    %208 = vmatpush1.msra.mxu0 %v86
    %209 = vmatprep.subr.mxu0 0.0
    %210 = vmatpush1.msra.mxu0 %v89
    %211 = vmatprep.subr.mxu0 0.0
    %212 = vmatpush1.msra.mxu0 %v92
    %213 = vmatprep.subr.mxu0 0.0
    %214 = vmatpush1.msra.mxu0 %v95
    %215 = vmatprep.subr.mxu0 0.0
    %216 = vmatpush1.msra.mxu0 %v98
    %217 = vmatprep.subr.mxu0 0.0
    %218 = vmatpush1.msra.mxu0 %v101
    %219 = vmatprep.subr.mxu0 0.0
    %220 = vmatpush1.msra.mxu0 0.0
    %221 = vmatprep.subr.mxu0 0.0
    %222 = vmatpush1.msra.mxu0 0.0
    %223 = vmatprep.subr.mxu0 0.0
    %224 = vmatpush1.msra.mxu0 0.0
    %225 = vmatprep.subr.mxu0 0.0
    %226 = vmatpush1.msra.mxu0 0.0
    %227 = vmatprep.subr.mxu0 0.0
    %228 = vmatpush1.msra.mxu0 0.0
    %229 = vmatprep.subr.mxu0 0.0
    %230 = vmatpush1.msra.mxu0 0.0
    %231 = vmatprep.subr.mxu0 0.0
    %232 = vmatpush1.msra.mxu0 0.0
    %233 = vmatprep.subr.mxu0 0.0
    %234 = vmatpush1.msra.mxu0 0.0
    %235 = vmatprep.subr.mxu0 0.0
    %236 = vmatpush1.msra.mxu0 0.0
    %237 = vmatprep.subr.mxu0 0.0
    %238 = vmatpush1.msra.mxu0 0.0
    %239 = vmatprep.subr.mxu0 0.0
    %240 = vmatpush1.msra.mxu0 0.0
    %241 = vmatprep.subr.mxu0 0.0
    %242 = vmatpush1.msra.mxu0 0.0
    %243 = vmatprep.subr.mxu0 0.0
    %244 = vmatpush1.msra.mxu0 0.0
    %245 = vmatprep.subr.mxu0 0.0
    %246 = vmatpush1.msra.mxu0 0.0
    %247 = vmatprep.subr.mxu0 0.0
    %248 = vmatpush1.msra.mxu0 0.0
    %249 = vmatprep.subr.mxu0 0.0
    %250 = vmatpush1.msra.mxu0 0.0
    %251 = vmatprep.subr.mxu0 0.0
    %252 = vmatpush1.msra.mxu0 0.0
    %253 = vmatprep.subr.mxu0 0.0
    %254 = vmatpush1.msra.mxu0 0.0
    %255 = vmatprep.subr.mxu0 0.0
    %256 = vmatpush1.msra.mxu0 0.0
    %257 = vmatprep.subr.mxu0 0.0
    %258 = vmatpush1.msra.mxu0 0.0
    %259 = vmatprep.subr.mxu0 0.0
    %260 = vmatpush1.msra.mxu0 0.0
    %261 = vmatprep.subr.mxu0 0.0
    %262 = vmatpush1.msra.mxu0 0.0
    %263 = vmatprep.subr.mxu0 0.0
    %264 = vmatpush1.msra.mxu0 0.0
    %265 = vmatprep.subr.mxu0 0.0
    %266 = vmatpush1.msra.mxu0 0.0
    %267 = vmatprep.mubr.f32.mxu0 0.0
    %268 = vmatmul.mubr.f32.gmra.mrb[0].mxu0 %v121
    %v269 = vpop.f32.mrb[0].mxu0
    %v270 = vadd.f32 %v115, %v269
    %v271 = vpop.f32.mrb[0].mxu0
    %272 = vmatprep.mubr.f32.mxu0 0.0
    %273 = vmatmul.mubr.f32.gmra.mrb[0].mxu0 %v124
    %v274 = vpop.f32.mrb[0].mxu0
    %v275 = vadd.f32 %v115, %v274
    %v276 = vpop.f32.mrb[0].mxu0
    %277 = vdwg.mxu0
    %v278 = vld [vmem:[#allocation8] sm:$0xff]
    %v279 = vld [vmem:[#allocation8 + $0x8] sm:$0xff]
    %v280 = vld [vmem:[#allocation8 + $0x10] sm:$0xff]
    %v281 = vld [vmem:[#allocation8 + $0x18] sm:$0xff]
    %v282 = vld [vmem:[#allocation8 + $0x20] sm:$0xff]
    %v283 = vld [vmem:[#allocation8 + $0x28] sm:$0xff]
    %v284 = vld [vmem:[#allocation8 + $0x30] sm:$0xff]
    %v285 = vld [vmem:[#allocation8 + $0x38] sm:$0xff]
    %v286 = vld [vmem:[#allocation8 + $0x40] sm:$0xff]
    %v287 = vld [vmem:[#allocation8 + $0x48] sm:$0xff]
    %v288 = vld [vmem:[#allocation8 + $0x50] sm:$0xff]
    %v289 = vld [vmem:[#allocation8 + $0x58] sm:$0xff]
    %v290 = vld [vmem:[#allocation8 + $0x60] sm:$0xff]
    %v291 = vld [vmem:[#allocation8 + $0x68] sm:$0xff]
    %v292 = vld [vmem:[#allocation8 + $0x70] sm:$0xff]
    %v293 = vld [vmem:[#allocation8 + $0x78] sm:$0xff]
    %v294 = vld [vmem:[#allocation8 + $0x80] sm:$0xff]
    %v295 = vld [vmem:[#allocation8 + $0x88] sm:$0xff]
    %v296 = vld [vmem:[#allocation8 + $0x90] sm:$0xff]
    %v297 = vld [vmem:[#allocation8 + $0x98] sm:$0xff]
    %v298 = vld [vmem:[#allocation8 + $0xa0] sm:$0xff]
    %v299 = vld [vmem:[#allocation8 + $0xa8] sm:$0xff]
    %v300 = vld [vmem:[#allocation8 + $0xb0] sm:$0xff]
    %v301 = vld [vmem:[#allocation8 + $0xb8] sm:$0xff]
    %v302 = vld [vmem:[%s4] sm:$0x1]
    %v304 = vsel %vm119, 0.0, 0
    %306 = vmatprep.subr.mxu0 %v279
    %307 = vmatpush1.msra.mxu0 %v278
    %308 = vmatprep.subr.mxu0 %v282
    %309 = vmatpush1.msra.mxu0 %v281
    %310 = vmatprep.subr.mxu0 %v285
    %311 = vmatpush1.msra.mxu0 %v284
    %312 = vmatprep.subr.mxu0 %v288
    %313 = vmatpush1.msra.mxu0 %v287
    %314 = vmatprep.subr.mxu0 %v291
    %315 = vmatpush1.msra.mxu0 %v290
    %316 = vmatprep.subr.mxu0 %v294
    %317 = vmatpush1.msra.mxu0 %v293
    %318 = vmatprep.subr.mxu0 %v297
    %319 = vmatpush1.msra.mxu0 %v296
    %320 = vmatprep.subr.mxu0 %v300
    %321 = vmatpush1.msra.mxu0 %v299
    %322 = vmatprep.subr.mxu0 0.0
    %323 = vmatpush1.msra.mxu0 0.0
    %324 = vmatprep.subr.mxu0 0.0
    %325 = vmatpush1.msra.mxu0 0.0
    %326 = vmatprep.subr.mxu0 0.0
    %327 = vmatpush1.msra.mxu0 0.0
    %328 = vmatprep.subr.mxu0 0.0
    %329 = vmatpush1.msra.mxu0 0.0
    %330 = vmatprep.subr.mxu0 0.0
    %331 = vmatpush1.msra.mxu0 0.0
    %332 = vmatprep.subr.mxu0 0.0
    %333 = vmatpush1.msra.mxu0 0.0
    %334 = vmatprep.subr.mxu0 0.0
    %335 = vmatpush1.msra.mxu0 0.0
    %336 = vmatprep.subr.mxu0 0.0
    %337 = vmatpush1.msra.mxu0 0.0
    %338 = vmatprep.subr.mxu0 0.0
    %339 = vmatpush1.msra.mxu0 0.0
    %340 = vmatprep.subr.mxu0 0.0
    %341 = vmatpush1.msra.mxu0 0.0
    %342 = vmatprep.subr.mxu0 0.0
    %343 = vmatpush1.msra.mxu0 0.0
    %344 = vmatprep.subr.mxu0 0.0
    %345 = vmatpush1.msra.mxu0 0.0
    %346 = vmatprep.subr.mxu0 0.0
    %347 = vmatpush1.msra.mxu0 0.0
    %348 = vmatprep.subr.mxu0 0.0
    %349 = vmatpush1.msra.mxu0 0.0
    %350 = vmatprep.subr.mxu0 0.0
    %351 = vmatpush1.msra.mxu0 0.0
    %352 = vmatprep.subr.mxu0 0.0
    %353 = vmatpush1.msra.mxu0 0.0
    %354 = vmatprep.subr.mxu0 0.0
    %355 = vmatpush1.msra.mxu0 0.0
    %356 = vmatprep.subr.mxu0 0.0
    %357 = vmatpush1.msra.mxu0 0.0
    %358 = vmatprep.subr.mxu0 0.0
    %359 = vmatpush1.msra.mxu0 0.0
    %360 = vmatprep.subr.mxu0 0.0
    %361 = vmatpush1.msra.mxu0 0.0
    %362 = vmatprep.subr.mxu0 0.0
    %363 = vmatpush1.msra.mxu0 0.0
    %364 = vmatprep.subr.mxu0 0.0
    %365 = vmatpush1.msra.mxu0 0.0
    %366 = vmatprep.subr.mxu0 0.0
    %367 = vmatpush1.msra.mxu0 0.0
    %368 = vmatprep.subr.mxu0 0.0
    %369 = vmatpush1.msra.mxu0 0.0
    %370 = vmatprep.mubr.f32.mxu0 0.0
    %371 = vmatmul.mubr.f32.gmra.mrb[0].mxu0 %v304
    %v372 = vpop.f32.mrb[0].mxu0
    %v373 = vadd.f32 0.0, %v372
    %v374 = vpop.f32.mrb[0].mxu0
    %v375 = vadd.f32 0.0, %v374
    %376 = vdwg.mxu0
    %377 = vmatprep.subr.mxu0 0.0
    %378 = vmatpush1.msra.mxu0 %v280
    %379 = vmatprep.subr.mxu0 0.0
    %380 = vmatpush1.msra.mxu0 %v283
    %381 = vmatprep.subr.mxu0 0.0
    %382 = vmatpush1.msra.mxu0 %v286
    %383 = vmatprep.subr.mxu0 0.0
    %384 = vmatpush1.msra.mxu0 %v289
    %385 = vmatprep.subr.mxu0 0.0
    %386 = vmatpush1.msra.mxu0 %v292
    %387 = vmatprep.subr.mxu0 0.0
    %388 = vmatpush1.msra.mxu0 %v295
    %389 = vmatprep.subr.mxu0 0.0
    %390 = vmatpush1.msra.mxu0 %v298
    %391 = vmatprep.subr.mxu0 0.0
    %392 = vmatpush1.msra.mxu0 %v301
    %393 = vmatprep.subr.mxu0 0.0
    %394 = vmatpush1.msra.mxu0 0.0
    %395 = vmatprep.subr.mxu0 0.0
    %396 = vmatpush1.msra.mxu0 0.0
    %397 = vmatprep.subr.mxu0 0.0
    %398 = vmatpush1.msra.mxu0 0.0
    %399 = vmatprep.subr.mxu0 0.0
    %400 = vmatpush1.msra.mxu0 0.0
    %401 = vmatprep.subr.mxu0 0.0
    %402 = vmatpush1.msra.mxu0 0.0
    %403 = vmatprep.subr.mxu0 0.0
    %404 = vmatpush1.msra.mxu0 0.0
    %405 = vmatprep.subr.mxu0 0.0
    %406 = vmatpush1.msra.mxu0 0.0
    %407 = vmatprep.subr.mxu0 0.0
    %408 = vmatpush1.msra.mxu0 0.0
    %409 = vmatprep.subr.mxu0 0.0
    %410 = vmatpush1.msra.mxu0 0.0
    %411 = vmatprep.subr.mxu0 0.0
    %412 = vmatpush1.msra.mxu0 0.0
    %413 = vmatprep.subr.mxu0 0.0
    %414 = vmatpush1.msra.mxu0 0.0
    %415 = vmatprep.subr.mxu0 0.0
    %416 = vmatpush1.msra.mxu0 0.0
    %417 = vmatprep.subr.mxu0 0.0
    %418 = vmatpush1.msra.mxu0 0.0
    %419 = vmatprep.subr.mxu0 0.0
    %420 = vmatpush1.msra.mxu0 0.0
    %421 = vmatprep.subr.mxu0 0.0
    %422 = vmatpush1.msra.mxu0 0.0
    %423 = vmatprep.subr.mxu0 0.0
    %424 = vmatpush1.msra.mxu0 0.0
    %425 = vmatprep.subr.mxu0 0.0
    %426 = vmatpush1.msra.mxu0 0.0
    %427 = vmatprep.subr.mxu0 0.0
    %428 = vmatpush1.msra.mxu0 0.0
    %429 = vmatprep.subr.mxu0 0.0
    %430 = vmatpush1.msra.mxu0 0.0
    %431 = vmatprep.subr.mxu0 0.0
    %432 = vmatpush1.msra.mxu0 0.0
    %433 = vmatprep.subr.mxu0 0.0
    %434 = vmatpush1.msra.mxu0 0.0
    %435 = vmatprep.subr.mxu0 0.0
    %436 = vmatpush1.msra.mxu0 0.0
    %437 = vmatprep.subr.mxu0 0.0
    %438 = vmatpush1.msra.mxu0 0.0
    %439 = vmatprep.subr.mxu0 0.0
    %440 = vmatpush1.msra.mxu0 0.0
    %441 = vmatprep.mubr.f32.mxu0 0.0
    %442 = vmatmul.mubr.f32.gmra.mrb[0].mxu0 %v304
    %v443 = vpop.f32.mrb[0].mxu0
    %v444 = vadd.f32 0.0, %v443
    %v445 = vpop.f32.mrb[0].mxu0
    %446 = vdwg.mxu0
    %v447 = vadd.f32 %v193, %v373
    %v448 = vadd.f32 %v195, %v375
    %v449 = vxor.u32 %v447, 2147483648
    %v450 = vxor.u32 %v448, 2147483648
    %v451 = vmul.f32 %v449, 1.442695
    %v452 = vpow.pop %v451
    %v453 = vmul.f32 %v450, 1.442695
    %v454 = vpow.pop %v453
    %v455 = vadd.f32 %v452, 1.0
    %v456 = vadd.f32 %v454, 1.0
    %v457 = vrcp.pop %v455
    %v458 = vmul.f32 1.0, %v457
    %v459 = vrcp.pop %v456
    %v460 = vmul.f32 1.0, %v459
    %v462 = vlaneseq
    %v463 = vshrl.u32 %v462, 7
    %v464 = vsub.s32 0, %v463
    %v465 = vrot.slane %v302, %v464
    %v467 = vadd.f32 %v444, %v465
    %v468 = vmul.f32 %v458, %v467
    %v469 = vadd.f32 %v270, %v468
    %v470 = vtanh.pop %v469
    %v471 = vsub.f32 1.0, %v460
    %v472 = vmul.f32 %v471, %v470
    %v473 = vmul.f32 %v460, 0.0
    %v474 = vadd.f32 %v472, %v473
    %v476 = vsel %vm119, %v474, 0
    %478 = vmatprep.subr.mxu0 %v279
    %479 = vmatpush1.msra.mxu0 %v278
    %480 = vmatprep.subr.mxu0 %v282
    %481 = vmatpush1.msra.mxu0 %v281
    %482 = vmatprep.subr.mxu0 %v285
    %483 = vmatpush1.msra.mxu0 %v284
    %484 = vmatprep.subr.mxu0 %v288
    %485 = vmatpush1.msra.mxu0 %v287
    %486 = vmatprep.subr.mxu0 %v291
    %487 = vmatpush1.msra.mxu0 %v290
    %488 = vmatprep.subr.mxu0 %v294
    %489 = vmatpush1.msra.mxu0 %v293
    %490 = vmatprep.subr.mxu0 %v297
    %491 = vmatpush1.msra.mxu0 %v296
    %492 = vmatprep.subr.mxu0 %v300
    %493 = vmatpush1.msra.mxu0 %v299
    %494 = vmatprep.subr.mxu0 0.0
    %495 = vmatpush1.msra.mxu0 0.0
    %496 = vmatprep.subr.mxu0 0.0
    %497 = vmatpush1.msra.mxu0 0.0
    %498 = vmatprep.subr.mxu0 0.0
    %499 = vmatpush1.msra.mxu0 0.0
    %500 = vmatprep.subr.mxu0 0.0
    %501 = vmatpush1.msra.mxu0 0.0
    %502 = vmatprep.subr.mxu0 0.0
    %503 = vmatpush1.msra.mxu0 0.0
    %504 = vmatprep.subr.mxu0 0.0
    %505 = vmatpush1.msra.mxu0 0.0
    %506 = vmatprep.subr.mxu0 0.0
    %507 = vmatpush1.msra.mxu0 0.0
    %508 = vmatprep.subr.mxu0 0.0
    %509 = vmatpush1.msra.mxu0 0.0
    %510 = vmatprep.subr.mxu0 0.0
    %511 = vmatpush1.msra.mxu0 0.0
    %512 = vmatprep.subr.mxu0 0.0
    %513 = vmatpush1.msra.mxu0 0.0
    %514 = vmatprep.subr.mxu0 0.0
    %515 = vmatpush1.msra.mxu0 0.0
    %516 = vmatprep.subr.mxu0 0.0
    %517 = vmatpush1.msra.mxu0 0.0
    %518 = vmatprep.subr.mxu0 0.0
    %519 = vmatpush1.msra.mxu0 0.0
    %520 = vmatprep.subr.mxu0 0.0
    %521 = vmatpush1.msra.mxu0 0.0
    %522 = vmatprep.subr.mxu0 0.0
    %523 = vmatpush1.msra.mxu0 0.0
    %524 = vmatprep.subr.mxu0 0.0
    %525 = vmatpush1.msra.mxu0 0.0
    %526 = vmatprep.subr.mxu0 0.0
    %527 = vmatpush1.msra.mxu0 0.0
    %528 = vmatprep.subr.mxu0 0.0
    %529 = vmatpush1.msra.mxu0 0.0
    %530 = vmatprep.subr.mxu0 0.0
    %531 = vmatpush1.msra.mxu0 0.0
    %532 = vmatprep.subr.mxu0 0.0
    %533 = vmatpush1.msra.mxu0 0.0
    %534 = vmatprep.subr.mxu0 0.0
    %535 = vmatpush1.msra.mxu0 0.0
    %536 = vmatprep.subr.mxu0 0.0
    %537 = vmatpush1.msra.mxu0 0.0
    %538 = vmatprep.subr.mxu0 0.0
    %539 = vmatpush1.msra.mxu0 0.0
    %540 = vmatprep.subr.mxu0 0.0
    %541 = vmatpush1.msra.mxu0 0.0
    %542 = vmatprep.mubr.f32.mxu0 0.0
    %543 = vmatmul.mubr.f32.gmra.mrb[0].mxu0 %v476
    %v544 = vpop.f32.mrb[0].mxu0
    %v545 = vadd.f32 0.0, %v544
    %v546 = vpop.f32.mrb[0].mxu0
    %v547 = vadd.f32 0.0, %v546
    %548 = vdwg.mxu0
    %549 = vmatprep.subr.mxu0 0.0
    %550 = vmatpush1.msra.mxu0 %v280
    %551 = vmatprep.subr.mxu0 0.0
    %552 = vmatpush1.msra.mxu0 %v283
    %553 = vmatprep.subr.mxu0 0.0
    %554 = vmatpush1.msra.mxu0 %v286
    %555 = vmatprep.subr.mxu0 0.0
    %556 = vmatpush1.msra.mxu0 %v289
    %557 = vmatprep.subr.mxu0 0.0
    %558 = vmatpush1.msra.mxu0 %v292
    %559 = vmatprep.subr.mxu0 0.0
    %560 = vmatpush1.msra.mxu0 %v295
    %561 = vmatprep.subr.mxu0 0.0
    %562 = vmatpush1.msra.mxu0 %v298
    %563 = vmatprep.subr.mxu0 0.0
    %564 = vmatpush1.msra.mxu0 %v301
    %565 = vmatprep.subr.mxu0 0.0
    %566 = vmatpush1.msra.mxu0 0.0
    %567 = vmatprep.subr.mxu0 0.0
    %568 = vmatpush1.msra.mxu0 0.0
    %569 = vmatprep.subr.mxu0 0.0
    %570 = vmatpush1.msra.mxu0 0.0
    %571 = vmatprep.subr.mxu0 0.0
    %572 = vmatpush1.msra.mxu0 0.0
    %573 = vmatprep.subr.mxu0 0.0
    %574 = vmatpush1.msra.mxu0 0.0
    %575 = vmatprep.subr.mxu0 0.0
    %576 = vmatpush1.msra.mxu0 0.0
    %577 = vmatprep.subr.mxu0 0.0
    %578 = vmatpush1.msra.mxu0 0.0
    %579 = vmatprep.subr.mxu0 0.0
    %580 = vmatpush1.msra.mxu0 0.0
    %581 = vmatprep.subr.mxu0 0.0
    %582 = vmatpush1.msra.mxu0 0.0
    %583 = vmatprep.subr.mxu0 0.0
    %584 = vmatpush1.msra.mxu0 0.0
    %585 = vmatprep.subr.mxu0 0.0
    %586 = vmatpush1.msra.mxu0 0.0
    %587 = vmatprep.subr.mxu0 0.0
    %588 = vmatpush1.msra.mxu0 0.0
    %589 = vmatprep.subr.mxu0 0.0
    %590 = vmatpush1.msra.mxu0 0.0
    %591 = vmatprep.subr.mxu0 0.0
    %592 = vmatpush1.msra.mxu0 0.0
    %593 = vmatprep.subr.mxu0 0.0
    %594 = vmatpush1.msra.mxu0 0.0
    %595 = vmatprep.subr.mxu0 0.0
    %596 = vmatpush1.msra.mxu0 0.0
    %597 = vmatprep.subr.mxu0 0.0
    %598 = vmatpush1.msra.mxu0 0.0
    %599 = vmatprep.subr.mxu0 0.0
    %600 = vmatpush1.msra.mxu0 0.0
    %601 = vmatprep.subr.mxu0 0.0
    %602 = vmatpush1.msra.mxu0 0.0
    %603 = vmatprep.subr.mxu0 0.0
    %604 = vmatpush1.msra.mxu0 0.0
    %605 = vmatprep.subr.mxu0 0.0
    %606 = vmatpush1.msra.mxu0 0.0
    %607 = vmatprep.subr.mxu0 0.0
    %608 = vmatpush1.msra.mxu0 0.0
    %609 = vmatprep.subr.mxu0 0.0
    %610 = vmatpush1.msra.mxu0 0.0
    %611 = vmatprep.subr.mxu0 0.0
    %612 = vmatpush1.msra.mxu0 0.0
    %613 = vmatprep.mubr.f32.mxu0 0.0
    %614 = vmatmul.mubr.f32.gmra.mrb[0].mxu0 %v476
    %v615 = vpop.f32.mrb[0].mxu0
    %v616 = vadd.f32 0.0, %v615
    %v617 = vpop.f32.mrb[0].mxu0
    %618 = vdwg.mxu0
    %v621 = vrot.slane %v545, 6
    %v622 = vrot.slane %v547, 6
    %v625 = vadd.f32 %v193, %v621
    %v626 = vadd.f32 %v195, %v622
    %v627 = vxor.u32 %v625, 2147483648
    %v628 = vxor.u32 %v626, 2147483648
    %v629 = vmul.f32 %v627, 1.442695
    %v630 = vpow.pop %v629
    %v631 = vmul.f32 %v628, 1.442695
    %v632 = vpow.pop %v631
    %v633 = vadd.f32 %v630, 1.0
    %v634 = vadd.f32 %v632, 1.0
    %v635 = vrcp.pop %v633
    %v636 = vmul.f32 1.0, %v635
    %v637 = vrcp.pop %v634
    %v638 = vmul.f32 1.0, %v637
    %v639 = vadd.f32 %v616, %v465
    %v641 = vrot.slane %v639, 6
    %v643 = vmul.f32 %v636, %v641
    %v644 = vadd.f32 %v270, %v643
    %v645 = vtanh.pop %v644
    %v646 = vsub.f32 1.0, %v638
    %v647 = vmul.f32 %v646, %v645
    %v648 = vrot.slane %v474, 6
    %v650 = vmul.f32 %v638, %v648
    %v651 = vadd.f32 %v647, %v650
    %v653 = vrot.slane %v651, 2
    %v654 = vsel %vm119, %v653, 0
    %656 = vmatprep.subr.mxu0 %v279
    %657 = vmatpush1.msra.mxu0 %v278
    %658 = vmatprep.subr.mxu0 %v282
    %659 = vmatpush1.msra.mxu0 %v281
    %660 = vmatprep.subr.mxu0 %v285
    %661 = vmatpush1.msra.mxu0 %v284
    %662 = vmatprep.subr.mxu0 %v288
    %663 = vmatpush1.msra.mxu0 %v287
    %664 = vmatprep.subr.mxu0 %v291
    %665 = vmatpush1.msra.mxu0 %v290
    %666 = vmatprep.subr.mxu0 %v294
    %667 = vmatpush1.msra.mxu0 %v293
    %668 = vmatprep.subr.mxu0 %v297
    %669 = vmatpush1.msra.mxu0 %v296
    %670 = vmatprep.subr.mxu0 %v300
    %671 = vmatpush1.msra.mxu0 %v299
    %672 = vmatprep.subr.mxu0 0.0
    %673 = vmatpush1.msra.mxu0 0.0
    %674 = vmatprep.subr.mxu0 0.0
    %675 = vmatpush1.msra.mxu0 0.0
    %676 = vmatprep.subr.mxu0 0.0
    %677 = vmatpush1.msra.mxu0 0.0
    %678 = vmatprep.subr.mxu0 0.0
    %679 = vmatpush1.msra.mxu0 0.0
    %680 = vmatprep.subr.mxu0 0.0
    %681 = vmatpush1.msra.mxu0 0.0
    %682 = vmatprep.subr.mxu0 0.0
    %683 = vmatpush1.msra.mxu0 0.0
    %684 = vmatprep.subr.mxu0 0.0
    %685 = vmatpush1.msra.mxu0 0.0
    %686 = vmatprep.subr.mxu0 0.0
    %687 = vmatpush1.msra.mxu0 0.0
    %688 = vmatprep.subr.mxu0 0.0
    %689 = vmatpush1.msra.mxu0 0.0
    %690 = vmatprep.subr.mxu0 0.0
    %691 = vmatpush1.msra.mxu0 0.0
    %692 = vmatprep.subr.mxu0 0.0
    %693 = vmatpush1.msra.mxu0 0.0
    %694 = vmatprep.subr.mxu0 0.0
    %695 = vmatpush1.msra.mxu0 0.0
    %696 = vmatprep.subr.mxu0 0.0
    %697 = vmatpush1.msra.mxu0 0.0
    %698 = vmatprep.subr.mxu0 0.0
    %699 = vmatpush1.msra.mxu0 0.0
    %700 = vmatprep.subr.mxu0 0.0
    %701 = vmatpush1.msra.mxu0 0.0
    %702 = vmatprep.subr.mxu0 0.0
    %703 = vmatpush1.msra.mxu0 0.0
    %704 = vmatprep.subr.mxu0 0.0
    %705 = vmatpush1.msra.mxu0 0.0
    %706 = vmatprep.subr.mxu0 0.0
    %707 = vmatpush1.msra.mxu0 0.0
    %708 = vmatprep.subr.mxu0 0.0
    %709 = vmatpush1.msra.mxu0 0.0
    %710 = vmatprep.subr.mxu0 0.0
    %711 = vmatpush1.msra.mxu0 0.0
    %712 = vmatprep.subr.mxu0 0.0
    %713 = vmatpush1.msra.mxu0 0.0
    %714 = vmatprep.subr.mxu0 0.0
    %715 = vmatpush1.msra.mxu0 0.0
    %716 = vmatprep.subr.mxu0 0.0
    %717 = vmatpush1.msra.mxu0 0.0
    %718 = vmatprep.subr.mxu0 0.0
    %719 = vmatpush1.msra.mxu0 0.0
    %720 = vmatprep.mubr.f32.mxu0 0.0
    %721 = vmatmul.mubr.f32.gmra.mrb[0].mxu0 %v654
    %v722 = vpop.f32.mrb[0].mxu0
    %v723 = vadd.f32 0.0, %v722
    %v724 = vpop.f32.mrb[0].mxu0
    %v725 = vadd.f32 0.0, %v724
    %726 = vdwg.mxu0
    %727 = vmatprep.subr.mxu0 0.0
    %728 = vmatpush1.msra.mxu0 %v280
    %729 = vmatprep.subr.mxu0 0.0
    %730 = vmatpush1.msra.mxu0 %v283
    %731 = vmatprep.subr.mxu0 0.0
    %732 = vmatpush1.msra.mxu0 %v286
    %733 = vmatprep.subr.mxu0 0.0
    %734 = vmatpush1.msra.mxu0 %v289
    %735 = vmatprep.subr.mxu0 0.0
    %736 = vmatpush1.msra.mxu0 %v292
    %737 = vmatprep.subr.mxu0 0.0
    %738 = vmatpush1.msra.mxu0 %v295
    %739 = vmatprep.subr.mxu0 0.0
    %740 = vmatpush1.msra.mxu0 %v298
    %741 = vmatprep.subr.mxu0 0.0
    %742 = vmatpush1.msra.mxu0 %v301
    %743 = vmatprep.subr.mxu0 0.0
    %744 = vmatpush1.msra.mxu0 0.0
    %745 = vmatprep.subr.mxu0 0.0
    %746 = vmatpush1.msra.mxu0 0.0
    %747 = vmatprep.subr.mxu0 0.0
    %748 = vmatpush1.msra.mxu0 0.0
    %749 = vmatprep.subr.mxu0 0.0
    %750 = vmatpush1.msra.mxu0 0.0
    %751 = vmatprep.subr.mxu0 0.0
    %752 = vmatpush1.msra.mxu0 0.0
    %753 = vmatprep.subr.mxu0 0.0
    %754 = vmatpush1.msra.mxu0 0.0
    %755 = vmatprep.subr.mxu0 0.0
    %756 = vmatpush1.msra.mxu0 0.0
    %757 = vmatprep.subr.mxu0 0.0
    %758 = vmatpush1.msra.mxu0 0.0
    %759 = vmatprep.subr.mxu0 0.0
    %760 = vmatpush1.msra.mxu0 0.0
    %761 = vmatprep.subr.mxu0 0.0
    %762 = vmatpush1.msra.mxu0 0.0
    %763 = vmatprep.subr.mxu0 0.0
    %764 = vmatpush1.msra.mxu0 0.0
    %765 = vmatprep.subr.mxu0 0.0
    %766 = vmatpush1.msra.mxu0 0.0
    %767 = vmatprep.subr.mxu0 0.0
    %768 = vmatpush1.msra.mxu0 0.0
    %769 = vmatprep.subr.mxu0 0.0
    %770 = vmatpush1.msra.mxu0 0.0
    %771 = vmatprep.subr.mxu0 0.0
    %772 = vmatpush1.msra.mxu0 0.0
    %773 = vmatprep.subr.mxu0 0.0
    %774 = vmatpush1.msra.mxu0 0.0
    %775 = vmatprep.subr.mxu0 0.0
    %776 = vmatpush1.msra.mxu0 0.0
    %777 = vmatprep.subr.mxu0 0.0
    %778 = vmatpush1.msra.mxu0 0.0
    %779 = vmatprep.subr.mxu0 0.0
    %780 = vmatpush1.msra.mxu0 0.0
    %781 = vmatprep.subr.mxu0 0.0
    %782 = vmatpush1.msra.mxu0 0.0
    %783 = vmatprep.subr.mxu0 0.0
    %784 = vmatpush1.msra.mxu0 0.0
    %785 = vmatprep.subr.mxu0 0.0
    %786 = vmatpush1.msra.mxu0 0.0
    %787 = vmatprep.subr.mxu0 0.0
    %788 = vmatpush1.msra.mxu0 0.0
    %789 = vmatprep.subr.mxu0 0.0
    %790 = vmatpush1.msra.mxu0 0.0
    %791 = vmatprep.mubr.f32.mxu0 0.0
    %792 = vmatmul.mubr.f32.gmra.mrb[0].mxu0 %v654
    %v793 = vpop.f32.mrb[0].mxu0
    %v794 = vadd.f32 0.0, %v793
    %v795 = vpop.f32.mrb[0].mxu0
    %796 = vdwg.mxu0
    %v799 = vrot.slane %v723, 4
    %v800 = vrot.slane %v725, 4
    %v803 = vadd.f32 %v193, %v799
    %v804 = vadd.f32 %v195, %v800
    %v805 = vxor.u32 %v803, 2147483648
    %v806 = vxor.u32 %v804, 2147483648
    %v807 = vmul.f32 %v805, 1.442695
    %v808 = vpow.pop %v807
    %v809 = vmul.f32 %v806, 1.442695
    %v810 = vpow.pop %v809
    %v811 = vadd.f32 %v808, 1.0
    %v812 = vadd.f32 %v810, 1.0
    %v813 = vrcp.pop %v811
    %v814 = vmul.f32 1.0, %v813
    %v815 = vrcp.pop %v812
    %v816 = vmul.f32 1.0, %v815
    %v817 = vadd.f32 %v794, %v465
    %v819 = vrot.slane %v817, 4
    %v821 = vmul.f32 %v814, %v819
    %v822 = vadd.f32 %v270, %v821
    %v823 = vtanh.pop %v822
    %v824 = vsub.f32 1.0, %v816
    %v825 = vmul.f32 %v824, %v823
    %v826 = vrot.slane %v651, 6
    %v828 = vmul.f32 %v816, %v826
    %v829 = vadd.f32 %v825, %v828
    %v831 = vrot.slane %v829, 4
    %v832 = vsel %vm119, %v831, 0
    %834 = vmatprep.subr.mxu0 %v279
    %835 = vmatpush1.msra.mxu0 %v278
    %836 = vmatprep.subr.mxu0 %v282
    %837 = vmatpush1.msra.mxu0 %v281
    %838 = vmatprep.subr.mxu0 %v285
    %839 = vmatpush1.msra.mxu0 %v284
    %840 = vmatprep.subr.mxu0 %v288
    %841 = vmatpush1.msra.mxu0 %v287
    %842 = vmatprep.subr.mxu0 %v291
    %843 = vmatpush1.msra.mxu0 %v290
    %844 = vmatprep.subr.mxu0 %v294
    %845 = vmatpush1.msra.mxu0 %v293
    %846 = vmatprep.subr.mxu0 %v297
    %847 = vmatpush1.msra.mxu0 %v296
    %848 = vmatprep.subr.mxu0 %v300
    %849 = vmatpush1.msra.mxu0 %v299
    %850 = vmatprep.subr.mxu0 0.0
    %851 = vmatpush1.msra.mxu0 0.0
    %852 = vmatprep.subr.mxu0 0.0
    %853 = vmatpush1.msra.mxu0 0.0
    %854 = vmatprep.subr.mxu0 0.0
    %855 = vmatpush1.msra.mxu0 0.0
    %856 = vmatprep.subr.mxu0 0.0
    %857 = vmatpush1.msra.mxu0 0.0
    %858 = vmatprep.subr.mxu0 0.0
    %859 = vmatpush1.msra.mxu0 0.0
    %860 = vmatprep.subr.mxu0 0.0
    %861 = vmatpush1.msra.mxu0 0.0
    %862 = vmatprep.subr.mxu0 0.0
    %863 = vmatpush1.msra.mxu0 0.0
    %864 = vmatprep.subr.mxu0 0.0
    %865 = vmatpush1.msra.mxu0 0.0
    %866 = vmatprep.subr.mxu0 0.0
    %867 = vmatpush1.msra.mxu0 0.0
    %868 = vmatprep.subr.mxu0 0.0
    %869 = vmatpush1.msra.mxu0 0.0
    %870 = vmatprep.subr.mxu0 0.0
    %871 = vmatpush1.msra.mxu0 0.0
    %872 = vmatprep.subr.mxu0 0.0
    %873 = vmatpush1.msra.mxu0 0.0
    %874 = vmatprep.subr.mxu0 0.0
    %875 = vmatpush1.msra.mxu0 0.0
    %876 = vmatprep.subr.mxu0 0.0
    %877 = vmatpush1.msra.mxu0 0.0
    %878 = vmatprep.subr.mxu0 0.0
    %879 = vmatpush1.msra.mxu0 0.0
    %880 = vmatprep.subr.mxu0 0.0
    %881 = vmatpush1.msra.mxu0 0.0
    %882 = vmatprep.subr.mxu0 0.0
    %883 = vmatpush1.msra.mxu0 0.0
    %884 = vmatprep.subr.mxu0 0.0
    %885 = vmatpush1.msra.mxu0 0.0
    %886 = vmatprep.subr.mxu0 0.0
    %887 = vmatpush1.msra.mxu0 0.0
    %888 = vmatprep.subr.mxu0 0.0
    %889 = vmatpush1.msra.mxu0 0.0
    %890 = vmatprep.subr.mxu0 0.0
    %891 = vmatpush1.msra.mxu0 0.0
    %892 = vmatprep.subr.mxu0 0.0
    %893 = vmatpush1.msra.mxu0 0.0
    %894 = vmatprep.subr.mxu0 0.0
    %895 = vmatpush1.msra.mxu0 0.0
    %896 = vmatprep.subr.mxu0 0.0
    %897 = vmatpush1.msra.mxu0 0.0
    %898 = vmatprep.mubr.f32.mxu0 0.0
    %899 = vmatmul.mubr.f32.gmra.mrb[0].mxu0 %v832
    %v900 = vpop.f32.mrb[0].mxu0
    %v901 = vadd.f32 0.0, %v900
    %v902 = vpop.f32.mrb[0].mxu0
    %v903 = vadd.f32 0.0, %v902
    %904 = vdwg.mxu0
    %905 = vmatprep.subr.mxu0 0.0
    %906 = vmatpush1.msra.mxu0 %v280
    %907 = vmatprep.subr.mxu0 0.0
    %908 = vmatpush1.msra.mxu0 %v283
    %909 = vmatprep.subr.mxu0 0.0
    %910 = vmatpush1.msra.mxu0 %v286
    %911 = vmatprep.subr.mxu0 0.0
    %912 = vmatpush1.msra.mxu0 %v289
    %913 = vmatprep.subr.mxu0 0.0
    %914 = vmatpush1.msra.mxu0 %v292
    %915 = vmatprep.subr.mxu0 0.0
    %916 = vmatpush1.msra.mxu0 %v295
    %917 = vmatprep.subr.mxu0 0.0
    %918 = vmatpush1.msra.mxu0 %v298
    %919 = vmatprep.subr.mxu0 0.0
    %920 = vmatpush1.msra.mxu0 %v301
    %921 = vmatprep.subr.mxu0 0.0
    %922 = vmatpush1.msra.mxu0 0.0
    %923 = vmatprep.subr.mxu0 0.0
    %924 = vmatpush1.msra.mxu0 0.0
    %925 = vmatprep.subr.mxu0 0.0
    %926 = vmatpush1.msra.mxu0 0.0
    %927 = vmatprep.subr.mxu0 0.0
    %928 = vmatpush1.msra.mxu0 0.0
    %929 = vmatprep.subr.mxu0 0.0
    %930 = vmatpush1.msra.mxu0 0.0
    %931 = vmatprep.subr.mxu0 0.0
    %932 = vmatpush1.msra.mxu0 0.0
    %933 = vmatprep.subr.mxu0 0.0
    %934 = vmatpush1.msra.mxu0 0.0
    %935 = vmatprep.subr.mxu0 0.0
    %936 = vmatpush1.msra.mxu0 0.0
    %937 = vmatprep.subr.mxu0 0.0
    %938 = vmatpush1.msra.mxu0 0.0
    %939 = vmatprep.subr.mxu0 0.0
    %940 = vmatpush1.msra.mxu0 0.0
    %941 = vmatprep.subr.mxu0 0.0
    %942 = vmatpush1.msra.mxu0 0.0
    %943 = vmatprep.subr.mxu0 0.0
    %944 = vmatpush1.msra.mxu0 0.0
    %945 = vmatprep.subr.mxu0 0.0
    %946 = vmatpush1.msra.mxu0 0.0
    %947 = vmatprep.subr.mxu0 0.0
    %948 = vmatpush1.msra.mxu0 0.0
    %949 = vmatprep.subr.mxu0 0.0
    %950 = vmatpush1.msra.mxu0 0.0
    %951 = vmatprep.subr.mxu0 0.0
    %952 = vmatpush1.msra.mxu0 0.0
    %953 = vmatprep.subr.mxu0 0.0
    %954 = vmatpush1.msra.mxu0 0.0
    %955 = vmatprep.subr.mxu0 0.0
    %956 = vmatpush1.msra.mxu0 0.0
    %957 = vmatprep.subr.mxu0 0.0
    %958 = vmatpush1.msra.mxu0 0.0
    %959 = vmatprep.subr.mxu0 0.0
    %960 = vmatpush1.msra.mxu0 0.0
    %961 = vmatprep.subr.mxu0 0.0
    %962 = vmatpush1.msra.mxu0 0.0
    %963 = vmatprep.subr.mxu0 0.0
    %964 = vmatpush1.msra.mxu0 0.0
    %965 = vmatprep.subr.mxu0 0.0
    %966 = vmatpush1.msra.mxu0 0.0
    %967 = vmatprep.subr.mxu0 0.0
    %968 = vmatpush1.msra.mxu0 0.0
    %969 = vmatprep.mubr.f32.mxu0 0.0
    %970 = vmatmul.mubr.f32.gmra.mrb[0].mxu0 %v832
    %v971 = vpop.f32.mrb[0].mxu0
    %v972 = vadd.f32 0.0, %v971
    %v973 = vpop.f32.mrb[0].mxu0
    %974 = vdwg.mxu0
    %v977 = vrot.slane %v901, 2
    %v978 = vrot.slane %v903, 2
    %v981 = vadd.f32 %v193, %v977
    %v982 = vadd.f32 %v195, %v978
    %v983 = vxor.u32 %v981, 2147483648
    %v984 = vxor.u32 %v982, 2147483648
    %v985 = vmul.f32 %v983, 1.442695
    %v986 = vpow.pop %v985
    %v987 = vmul.f32 %v984, 1.442695
    %v988 = vpow.pop %v987
    %v989 = vadd.f32 %v986, 1.0
    %v990 = vadd.f32 %v988, 1.0
    %v991 = vrcp.pop %v989
    %v992 = vmul.f32 1.0, %v991
    %v993 = vrcp.pop %v990
    %v994 = vmul.f32 1.0, %v993
    %v995 = vadd.f32 %v972, %v465
    %v997 = vrot.slane %v995, 2
    %v999 = vmul.f32 %v992, %v997
    %v1000 = vadd.f32 %v270, %v999
    %v1001 = vtanh.pop %v1000
    %v1002 = vsub.f32 1.0, %v994
    %v1003 = vmul.f32 %v1002, %v1001
    %v1004 = vrot.slane %v829, 6
    %v1006 = vmul.f32 %v994, %v1004
    %v1007 = vadd.f32 %v1003, %v1006
    %v1009 = vrot.slane %v1007, 6
    %v1010 = vsel %vm119, %v1009, 0
    %1012 = vmatprep.subr.mxu0 %v279
    %1013 = vmatpush1.msra.mxu0 %v278
    %1014 = vmatprep.subr.mxu0 %v282
    %1015 = vmatpush1.msra.mxu0 %v281
    %1016 = vmatprep.subr.mxu0 %v285
    %1017 = vmatpush1.msra.mxu0 %v284
    %1018 = vmatprep.subr.mxu0 %v288
    %1019 = vmatpush1.msra.mxu0 %v287
    %1020 = vmatprep.subr.mxu0 %v291
    %1021 = vmatpush1.msra.mxu0 %v290
    %1022 = vmatprep.subr.mxu0 %v294
    %1023 = vmatpush1.msra.mxu0 %v293
    %1024 = vmatprep.subr.mxu0 %v297
    %1025 = vmatpush1.msra.mxu0 %v296
    %1026 = vmatprep.subr.mxu0 %v300
    %1027 = vmatpush1.msra.mxu0 %v299
    %1028 = vmatprep.subr.mxu0 0.0
    %1029 = vmatpush1.msra.mxu0 0.0
    %1030 = vmatprep.subr.mxu0 0.0
    %1031 = vmatpush1.msra.mxu0 0.0
    %1032 = vmatprep.subr.mxu0 0.0
    %1033 = vmatpush1.msra.mxu0 0.0
    %1034 = vmatprep.subr.mxu0 0.0
    %1035 = vmatpush1.msra.mxu0 0.0
    %1036 = vmatprep.subr.mxu0 0.0
    %1037 = vmatpush1.msra.mxu0 0.0
    %1038 = vmatprep.subr.mxu0 0.0
    %1039 = vmatpush1.msra.mxu0 0.0
    %1040 = vmatprep.subr.mxu0 0.0
    %1041 = vmatpush1.msra.mxu0 0.0
    %1042 = vmatprep.subr.mxu0 0.0
    %1043 = vmatpush1.msra.mxu0 0.0
    %1044 = vmatprep.subr.mxu0 0.0
    %1045 = vmatpush1.msra.mxu0 0.0
    %1046 = vmatprep.subr.mxu0 0.0
    %1047 = vmatpush1.msra.mxu0 0.0
    %1048 = vmatprep.subr.mxu0 0.0
    %1049 = vmatpush1.msra.mxu0 0.0
    %1050 = vmatprep.subr.mxu0 0.0
    %1051 = vmatpush1.msra.mxu0 0.0
    %1052 = vmatprep.subr.mxu0 0.0
    %1053 = vmatpush1.msra.mxu0 0.0
    %1054 = vmatprep.subr.mxu0 0.0
    %1055 = vmatpush1.msra.mxu0 0.0
    %1056 = vmatprep.subr.mxu0 0.0
    %1057 = vmatpush1.msra.mxu0 0.0
    %1058 = vmatprep.subr.mxu0 0.0
    %1059 = vmatpush1.msra.mxu0 0.0
    %1060 = vmatprep.subr.mxu0 0.0
    %1061 = vmatpush1.msra.mxu0 0.0
    %1062 = vmatprep.subr.mxu0 0.0
    %1063 = vmatpush1.msra.mxu0 0.0
    %1064 = vmatprep.subr.mxu0 0.0
    %1065 = vmatpush1.msra.mxu0 0.0
    %1066 = vmatprep.subr.mxu0 0.0
    %1067 = vmatpush1.msra.mxu0 0.0
    %1068 = vmatprep.subr.mxu0 0.0
    %1069 = vmatpush1.msra.mxu0 0.0
    %1070 = vmatprep.subr.mxu0 0.0
    %1071 = vmatpush1.msra.mxu0 0.0
    %1072 = vmatprep.subr.mxu0 0.0
    %1073 = vmatpush1.msra.mxu0 0.0
    %1074 = vmatprep.subr.mxu0 0.0
    %1075 = vmatpush1.msra.mxu0 0.0
    %1076 = vmatprep.mubr.f32.mxu0 0.0
    %1077 = vmatmul.mubr.f32.gmra.mrb[0].mxu0 %v1010
    %v1078 = vpop.f32.mrb[0].mxu0
    %v1079 = vadd.f32 0.0, %v1078
    %v1080 = vpop.f32.mrb[0].mxu0
    %v1081 = vadd.f32 0.0, %v1080
    %1082 = vdwg.mxu0
    %1083 = vmatprep.subr.mxu0 0.0
    %1084 = vmatpush1.msra.mxu0 %v280
    %1085 = vmatprep.subr.mxu0 0.0
    %1086 = vmatpush1.msra.mxu0 %v283
    %1087 = vmatprep.subr.mxu0 0.0
    %1088 = vmatpush1.msra.mxu0 %v286
    %1089 = vmatprep.subr.mxu0 0.0
    %1090 = vmatpush1.msra.mxu0 %v289
    %1091 = vmatprep.subr.mxu0 0.0
    %1092 = vmatpush1.msra.mxu0 %v292
    %1093 = vmatprep.subr.mxu0 0.0
    %1094 = vmatpush1.msra.mxu0 %v295
    %1095 = vmatprep.subr.mxu0 0.0
    %1096 = vmatpush1.msra.mxu0 %v298
    %1097 = vmatprep.subr.mxu0 0.0
    %1098 = vmatpush1.msra.mxu0 %v301
    %1099 = vmatprep.subr.mxu0 0.0
    %1100 = vmatpush1.msra.mxu0 0.0
    %1101 = vmatprep.subr.mxu0 0.0
    %1102 = vmatpush1.msra.mxu0 0.0
    %1103 = vmatprep.subr.mxu0 0.0
    %1104 = vmatpush1.msra.mxu0 0.0
    %1105 = vmatprep.subr.mxu0 0.0
    %1106 = vmatpush1.msra.mxu0 0.0
    %1107 = vmatprep.subr.mxu0 0.0
    %1108 = vmatpush1.msra.mxu0 0.0
    %1109 = vmatprep.subr.mxu0 0.0
    %1110 = vmatpush1.msra.mxu0 0.0
    %1111 = vmatprep.subr.mxu0 0.0
    %1112 = vmatpush1.msra.mxu0 0.0
    %1113 = vmatprep.subr.mxu0 0.0
    %1114 = vmatpush1.msra.mxu0 0.0
    %1115 = vmatprep.subr.mxu0 0.0
    %1116 = vmatpush1.msra.mxu0 0.0
    %1117 = vmatprep.subr.mxu0 0.0
    %1118 = vmatpush1.msra.mxu0 0.0
    %1119 = vmatprep.subr.mxu0 0.0
    %1120 = vmatpush1.msra.mxu0 0.0
    %1121 = vmatprep.subr.mxu0 0.0
    %1122 = vmatpush1.msra.mxu0 0.0
    %1123 = vmatprep.subr.mxu0 0.0
    %1124 = vmatpush1.msra.mxu0 0.0
    %1125 = vmatprep.subr.mxu0 0.0
    %1126 = vmatpush1.msra.mxu0 0.0
    %1127 = vmatprep.subr.mxu0 0.0
    %1128 = vmatpush1.msra.mxu0 0.0
    %1129 = vmatprep.subr.mxu0 0.0
    %1130 = vmatpush1.msra.mxu0 0.0
    %1131 = vmatprep.subr.mxu0 0.0
    %1132 = vmatpush1.msra.mxu0 0.0
    %1133 = vmatprep.subr.mxu0 0.0
    %1134 = vmatpush1.msra.mxu0 0.0
    %1135 = vmatprep.subr.mxu0 0.0
    %1136 = vmatpush1.msra.mxu0 0.0
    %1137 = vmatprep.subr.mxu0 0.0
    %1138 = vmatpush1.msra.mxu0 0.0
    %1139 = vmatprep.subr.mxu0 0.0
    %1140 = vmatpush1.msra.mxu0 0.0
    %1141 = vmatprep.subr.mxu0 0.0
    %1142 = vmatpush1.msra.mxu0 0.0
    %1143 = vmatprep.subr.mxu0 0.0
    %1144 = vmatpush1.msra.mxu0 0.0
    %1145 = vmatprep.subr.mxu0 0.0
    %1146 = vmatpush1.msra.mxu0 0.0
    %1147 = vmatprep.mubr.f32.mxu0 0.0
    %1148 = vmatmul.mubr.f32.gmra.mrb[0].mxu0 %v1010
    %v1149 = vpop.f32.mrb[0].mxu0
    %v1150 = vadd.f32 0.0, %v1149
    %v1151 = vpop.f32.mrb[0].mxu0
    %1152 = vdwg.mxu0
    %v1153 = vadd.f32 %v199, %v1079
    %v1154 = vadd.f32 %v201, %v1081
    %v1155 = vxor.u32 %v1153, 2147483648
    %v1156 = vxor.u32 %v1154, 2147483648
    %v1157 = vmul.f32 %v1155, 1.442695
    %v1158 = vpow.pop %v1157
    %v1159 = vmul.f32 %v1156, 1.442695
    %v1160 = vpow.pop %v1159
    %v1161 = vadd.f32 %v1158, 1.0
    %v1162 = vadd.f32 %v1160, 1.0
    %v1163 = vrcp.pop %v1161
    %v1164 = vmul.f32 1.0, %v1163
    %v1165 = vrcp.pop %v1162
    %v1166 = vmul.f32 1.0, %v1165
    %v1167 = vadd.f32 %v1150, %v465
    %v1168 = vmul.f32 %v1164, %v1167
    %v1169 = vadd.f32 %v275, %v1168
    %v1170 = vtanh.pop %v1169
    %v1171 = vsub.f32 1.0, %v1166
    %v1172 = vmul.f32 %v1171, %v1170
    %v1174 = vmul.f32 %v1166, %v1009
    %v1175 = vadd.f32 %v1172, %v1174
    %v1177 = vsel %vm119, %v1175, 0
    %1179 = vmatprep.subr.mxu0 %v279
    %1180 = vmatpush1.msra.mxu0 %v278
    %1181 = vmatprep.subr.mxu0 %v282
    %1182 = vmatpush1.msra.mxu0 %v281
    %1183 = vmatprep.subr.mxu0 %v285
    %1184 = vmatpush1.msra.mxu0 %v284
    %1185 = vmatprep.subr.mxu0 %v288
    %1186 = vmatpush1.msra.mxu0 %v287
    %1187 = vmatprep.subr.mxu0 %v291
    %1188 = vmatpush1.msra.mxu0 %v290
    %1189 = vmatprep.subr.mxu0 %v294
    %1190 = vmatpush1.msra.mxu0 %v293
    %1191 = vmatprep.subr.mxu0 %v297
    %1192 = vmatpush1.msra.mxu0 %v296
    %1193 = vmatprep.subr.mxu0 %v300
    %1194 = vmatpush1.msra.mxu0 %v299
    %1195 = vmatprep.subr.mxu0 0.0
    %1196 = vmatpush1.msra.mxu0 0.0
    %1197 = vmatprep.subr.mxu0 0.0
    %1198 = vmatpush1.msra.mxu0 0.0
    %1199 = vmatprep.subr.mxu0 0.0
    %1200 = vmatpush1.msra.mxu0 0.0
    %1201 = vmatprep.subr.mxu0 0.0
    %1202 = vmatpush1.msra.mxu0 0.0
    %1203 = vmatprep.subr.mxu0 0.0
    %1204 = vmatpush1.msra.mxu0 0.0
    %1205 = vmatprep.subr.mxu0 0.0
    %1206 = vmatpush1.msra.mxu0 0.0
    %1207 = vmatprep.subr.mxu0 0.0
    %1208 = vmatpush1.msra.mxu0 0.0
    %1209 = vmatprep.subr.mxu0 0.0
    %1210 = vmatpush1.msra.mxu0 0.0
    %1211 = vmatprep.subr.mxu0 0.0
    %1212 = vmatpush1.msra.mxu0 0.0
    %1213 = vmatprep.subr.mxu0 0.0
    %1214 = vmatpush1.msra.mxu0 0.0
    %1215 = vmatprep.subr.mxu0 0.0
    %1216 = vmatpush1.msra.mxu0 0.0
    %1217 = vmatprep.subr.mxu0 0.0
    %1218 = vmatpush1.msra.mxu0 0.0
    %1219 = vmatprep.subr.mxu0 0.0
    %1220 = vmatpush1.msra.mxu0 0.0
    %1221 = vmatprep.subr.mxu0 0.0
    %1222 = vmatpush1.msra.mxu0 0.0
    %1223 = vmatprep.subr.mxu0 0.0
    %1224 = vmatpush1.msra.mxu0 0.0
    %1225 = vmatprep.subr.mxu0 0.0
    %1226 = vmatpush1.msra.mxu0 0.0
    %1227 = vmatprep.subr.mxu0 0.0
    %1228 = vmatpush1.msra.mxu0 0.0
    %1229 = vmatprep.subr.mxu0 0.0
    %1230 = vmatpush1.msra.mxu0 0.0
    %1231 = vmatprep.subr.mxu0 0.0
    %1232 = vmatpush1.msra.mxu0 0.0
    %1233 = vmatprep.subr.mxu0 0.0
    %1234 = vmatpush1.msra.mxu0 0.0
    %1235 = vmatprep.subr.mxu0 0.0
    %1236 = vmatpush1.msra.mxu0 0.0
    %1237 = vmatprep.subr.mxu0 0.0
    %1238 = vmatpush1.msra.mxu0 0.0
    %1239 = vmatprep.subr.mxu0 0.0
    %1240 = vmatpush1.msra.mxu0 0.0
    %1241 = vmatprep.subr.mxu0 0.0
    %1242 = vmatpush1.msra.mxu0 0.0
    %1243 = vmatprep.mubr.f32.mxu0 0.0
    %1244 = vmatmul.mubr.f32.gmra.mrb[0].mxu0 %v1177
    %v1245 = vpop.f32.mrb[0].mxu0
    %v1246 = vadd.f32 0.0, %v1245
    %v1247 = vpop.f32.mrb[0].mxu0
    %v1248 = vadd.f32 0.0, %v1247
    %1249 = vdwg.mxu0
    %1250 = vmatprep.subr.mxu0 0.0
    %1251 = vmatpush1.msra.mxu0 %v280
    %1252 = vmatprep.subr.mxu0 0.0
    %1253 = vmatpush1.msra.mxu0 %v283
    %1254 = vmatprep.subr.mxu0 0.0
    %1255 = vmatpush1.msra.mxu0 %v286
    %1256 = vmatprep.subr.mxu0 0.0
    %1257 = vmatpush1.msra.mxu0 %v289
    %1258 = vmatprep.subr.mxu0 0.0
    %1259 = vmatpush1.msra.mxu0 %v292
    %1260 = vmatprep.subr.mxu0 0.0
    %1261 = vmatpush1.msra.mxu0 %v295
    %1262 = vmatprep.subr.mxu0 0.0
    %1263 = vmatpush1.msra.mxu0 %v298
    %1264 = vmatprep.subr.mxu0 0.0
    %1265 = vmatpush1.msra.mxu0 %v301
    %1266 = vmatprep.subr.mxu0 0.0
    %1267 = vmatpush1.msra.mxu0 0.0
    %1268 = vmatprep.subr.mxu0 0.0
    %1269 = vmatpush1.msra.mxu0 0.0
    %1270 = vmatprep.subr.mxu0 0.0
    %1271 = vmatpush1.msra.mxu0 0.0
    %1272 = vmatprep.subr.mxu0 0.0
    %1273 = vmatpush1.msra.mxu0 0.0
    %1274 = vmatprep.subr.mxu0 0.0
    %1275 = vmatpush1.msra.mxu0 0.0
    %1276 = vmatprep.subr.mxu0 0.0
    %1277 = vmatpush1.msra.mxu0 0.0
    %1278 = vmatprep.subr.mxu0 0.0
    %1279 = vmatpush1.msra.mxu0 0.0
    %1280 = vmatprep.subr.mxu0 0.0
    %1281 = vmatpush1.msra.mxu0 0.0
    %1282 = vmatprep.subr.mxu0 0.0
    %1283 = vmatpush1.msra.mxu0 0.0
    %1284 = vmatprep.subr.mxu0 0.0
    %1285 = vmatpush1.msra.mxu0 0.0
    %1286 = vmatprep.subr.mxu0 0.0
    %1287 = vmatpush1.msra.mxu0 0.0
    %1288 = vmatprep.subr.mxu0 0.0
    %1289 = vmatpush1.msra.mxu0 0.0
    %1290 = vmatprep.subr.mxu0 0.0
    %1291 = vmatpush1.msra.mxu0 0.0
    %1292 = vmatprep.subr.mxu0 0.0
    %1293 = vmatpush1.msra.mxu0 0.0
    %1294 = vmatprep.subr.mxu0 0.0
    %1295 = vmatpush1.msra.mxu0 0.0
    %1296 = vmatprep.subr.mxu0 0.0
    %1297 = vmatpush1.msra.mxu0 0.0
    %1298 = vmatprep.subr.mxu0 0.0
    %1299 = vmatpush1.msra.mxu0 0.0
    %1300 = vmatprep.subr.mxu0 0.0
    %1301 = vmatpush1.msra.mxu0 0.0
    %1302 = vmatprep.subr.mxu0 0.0
    %1303 = vmatpush1.msra.mxu0 0.0
    %1304 = vmatprep.subr.mxu0 0.0
    %1305 = vmatpush1.msra.mxu0 0.0
    %1306 = vmatprep.subr.mxu0 0.0
    %1307 = vmatpush1.msra.mxu0 0.0
    %1308 = vmatprep.subr.mxu0 0.0
    %1309 = vmatpush1.msra.mxu0 0.0
    %1310 = vmatprep.subr.mxu0 0.0
    %1311 = vmatpush1.msra.mxu0 0.0
    %1312 = vmatprep.subr.mxu0 0.0
    %1313 = vmatpush1.msra.mxu0 0.0
    %1314 = vmatprep.mubr.f32.mxu0 0.0
    %1315 = vmatmul.mubr.f32.gmra.mrb[0].mxu0 %v1177
    %v1316 = vpop.f32.mrb[0].mxu0
    %v1317 = vadd.f32 0.0, %v1316
    %v1318 = vpop.f32.mrb[0].mxu0
    %1319 = vdwg.mxu0
    %v1322 = vrot.slane %v1246, 6
    %v1323 = vrot.slane %v1248, 6
    %v1326 = vadd.f32 %v199, %v1322
    %v1327 = vadd.f32 %v201, %v1323
    %v1328 = vxor.u32 %v1326, 2147483648
    %v1329 = vxor.u32 %v1327, 2147483648
    %v1330 = vmul.f32 %v1328, 1.442695
    %v1331 = vpow.pop %v1330
    %v1332 = vmul.f32 %v1329, 1.442695
    %v1333 = vpow.pop %v1332
    %v1334 = vadd.f32 %v1331, 1.0
    %v1335 = vadd.f32 %v1333, 1.0
    %v1336 = vrcp.pop %v1334
    %v1337 = vmul.f32 1.0, %v1336
    %v1338 = vrcp.pop %v1335
    %v1339 = vmul.f32 1.0, %v1338
    %v1340 = vadd.f32 %v1317, %v465
    %v1342 = vrot.slane %v1340, 6
    %v1344 = vmul.f32 %v1337, %v1342
    %v1345 = vadd.f32 %v275, %v1344
    %v1346 = vtanh.pop %v1345
    %v1347 = vsub.f32 1.0, %v1339
    %v1348 = vmul.f32 %v1347, %v1346
    %v1349 = vrot.slane %v1175, 6
    %v1351 = vmul.f32 %v1339, %v1349
    %v1352 = vadd.f32 %v1348, %v1351
    %v1354 = vrot.slane %v1352, 2
    %v1355 = vsel %vm119, %v1354, 0
    %1357 = vmatprep.subr.mxu0 %v279
    %1358 = vmatpush1.msra.mxu0 %v278
    %1359 = vmatprep.subr.mxu0 %v282
    %1360 = vmatpush1.msra.mxu0 %v281
    %1361 = vmatprep.subr.mxu0 %v285
    %1362 = vmatpush1.msra.mxu0 %v284
    %1363 = vmatprep.subr.mxu0 %v288
    %1364 = vmatpush1.msra.mxu0 %v287
    %1365 = vmatprep.subr.mxu0 %v291
    %1366 = vmatpush1.msra.mxu0 %v290
    %1367 = vmatprep.subr.mxu0 %v294
    %1368 = vmatpush1.msra.mxu0 %v293
    %1369 = vmatprep.subr.mxu0 %v297
    %1370 = vmatpush1.msra.mxu0 %v296
    %1371 = vmatprep.subr.mxu0 %v300
    %1372 = vmatpush1.msra.mxu0 %v299
    %1373 = vmatprep.subr.mxu0 0.0
    %1374 = vmatpush1.msra.mxu0 0.0
    %1375 = vmatprep.subr.mxu0 0.0
    %1376 = vmatpush1.msra.mxu0 0.0
    %1377 = vmatprep.subr.mxu0 0.0
    %1378 = vmatpush1.msra.mxu0 0.0
    %1379 = vmatprep.subr.mxu0 0.0
    %1380 = vmatpush1.msra.mxu0 0.0
    %1381 = vmatprep.subr.mxu0 0.0
    %1382 = vmatpush1.msra.mxu0 0.0
    %1383 = vmatprep.subr.mxu0 0.0
    %1384 = vmatpush1.msra.mxu0 0.0
    %1385 = vmatprep.subr.mxu0 0.0
    %1386 = vmatpush1.msra.mxu0 0.0
    %1387 = vmatprep.subr.mxu0 0.0
    %1388 = vmatpush1.msra.mxu0 0.0
    %1389 = vmatprep.subr.mxu0 0.0
    %1390 = vmatpush1.msra.mxu0 0.0
    %1391 = vmatprep.subr.mxu0 0.0
    %1392 = vmatpush1.msra.mxu0 0.0
    %1393 = vmatprep.subr.mxu0 0.0
    %1394 = vmatpush1.msra.mxu0 0.0
    %1395 = vmatprep.subr.mxu0 0.0
    %1396 = vmatpush1.msra.mxu0 0.0
    %1397 = vmatprep.subr.mxu0 0.0
    %1398 = vmatpush1.msra.mxu0 0.0
    %1399 = vmatprep.subr.mxu0 0.0
    %1400 = vmatpush1.msra.mxu0 0.0
    %1401 = vmatprep.subr.mxu0 0.0
    %1402 = vmatpush1.msra.mxu0 0.0
    %1403 = vmatprep.subr.mxu0 0.0
    %1404 = vmatpush1.msra.mxu0 0.0
    %1405 = vmatprep.subr.mxu0 0.0
    %1406 = vmatpush1.msra.mxu0 0.0
    %1407 = vmatprep.subr.mxu0 0.0
    %1408 = vmatpush1.msra.mxu0 0.0
    %1409 = vmatprep.subr.mxu0 0.0
    %1410 = vmatpush1.msra.mxu0 0.0
    %1411 = vmatprep.subr.mxu0 0.0
    %1412 = vmatpush1.msra.mxu0 0.0
    %1413 = vmatprep.subr.mxu0 0.0
    %1414 = vmatpush1.msra.mxu0 0.0
    %1415 = vmatprep.subr.mxu0 0.0
    %1416 = vmatpush1.msra.mxu0 0.0
    %1417 = vmatprep.subr.mxu0 0.0
    %1418 = vmatpush1.msra.mxu0 0.0
    %1419 = vmatprep.subr.mxu0 0.0
    %1420 = vmatpush1.msra.mxu0 0.0
    %1421 = vmatprep.mubr.f32.mxu0 0.0
    %1422 = vmatmul.mubr.f32.gmra.mrb[0].mxu0 %v1355
    %v1423 = vpop.f32.mrb[0].mxu0
    %v1424 = vadd.f32 0.0, %v1423
    %v1425 = vpop.f32.mrb[0].mxu0
    %v1426 = vadd.f32 0.0, %v1425
    %1427 = vdwg.mxu0
    %1428 = vmatprep.subr.mxu0 0.0
    %1429 = vmatpush1.msra.mxu0 %v280
    %1430 = vmatprep.subr.mxu0 0.0
    %1431 = vmatpush1.msra.mxu0 %v283
    %1432 = vmatprep.subr.mxu0 0.0
    %1433 = vmatpush1.msra.mxu0 %v286
    %1434 = vmatprep.subr.mxu0 0.0
    %1435 = vmatpush1.msra.mxu0 %v289
    %1436 = vmatprep.subr.mxu0 0.0
    %1437 = vmatpush1.msra.mxu0 %v292
    %1438 = vmatprep.subr.mxu0 0.0
    %1439 = vmatpush1.msra.mxu0 %v295
    %1440 = vmatprep.subr.mxu0 0.0
    %1441 = vmatpush1.msra.mxu0 %v298
    %1442 = vmatprep.subr.mxu0 0.0
    %1443 = vmatpush1.msra.mxu0 %v301
    %1444 = vmatprep.subr.mxu0 0.0
    %1445 = vmatpush1.msra.mxu0 0.0
    %1446 = vmatprep.subr.mxu0 0.0
    %1447 = vmatpush1.msra.mxu0 0.0
    %1448 = vmatprep.subr.mxu0 0.0
    %1449 = vmatpush1.msra.mxu0 0.0
    %1450 = vmatprep.subr.mxu0 0.0
    %1451 = vmatpush1.msra.mxu0 0.0
    %1452 = vmatprep.subr.mxu0 0.0
    %1453 = vmatpush1.msra.mxu0 0.0
    %1454 = vmatprep.subr.mxu0 0.0
    %1455 = vmatpush1.msra.mxu0 0.0
    %1456 = vmatprep.subr.mxu0 0.0
    %1457 = vmatpush1.msra.mxu0 0.0
    %1458 = vmatprep.subr.mxu0 0.0
    %1459 = vmatpush1.msra.mxu0 0.0
    %1460 = vmatprep.subr.mxu0 0.0
    %1461 = vmatpush1.msra.mxu0 0.0
    %1462 = vmatprep.subr.mxu0 0.0
    %1463 = vmatpush1.msra.mxu0 0.0
    %1464 = vmatprep.subr.mxu0 0.0
    %1465 = vmatpush1.msra.mxu0 0.0
    %1466 = vmatprep.subr.mxu0 0.0
    %1467 = vmatpush1.msra.mxu0 0.0
    %1468 = vmatprep.subr.mxu0 0.0
    %1469 = vmatpush1.msra.mxu0 0.0
    %1470 = vmatprep.subr.mxu0 0.0
    %1471 = vmatpush1.msra.mxu0 0.0
    %1472 = vmatprep.subr.mxu0 0.0
    %1473 = vmatpush1.msra.mxu0 0.0
    %1474 = vmatprep.subr.mxu0 0.0
    %1475 = vmatpush1.msra.mxu0 0.0
    %1476 = vmatprep.subr.mxu0 0.0
    %1477 = vmatpush1.msra.mxu0 0.0
    %1478 = vmatprep.subr.mxu0 0.0
    %1479 = vmatpush1.msra.mxu0 0.0
    %1480 = vmatprep.subr.mxu0 0.0
    %1481 = vmatpush1.msra.mxu0 0.0
    %1482 = vmatprep.subr.mxu0 0.0
    %1483 = vmatpush1.msra.mxu0 0.0
    %1484 = vmatprep.subr.mxu0 0.0
    %1485 = vmatpush1.msra.mxu0 0.0
    %1486 = vmatprep.subr.mxu0 0.0
    %1487 = vmatpush1.msra.mxu0 0.0
    %1488 = vmatprep.subr.mxu0 0.0
    %1489 = vmatpush1.msra.mxu0 0.0
    %1490 = vmatprep.subr.mxu0 0.0
    %1491 = vmatpush1.msra.mxu0 0.0
    %1492 = vmatprep.mubr.f32.mxu0 0.0
    %1493 = vmatmul.mubr.f32.gmra.mrb[0].mxu0 %v1355
    %v1494 = vpop.f32.mrb[0].mxu0
    %v1495 = vadd.f32 0.0, %v1494
    %v1496 = vpop.f32.mrb[0].mxu0
    %1497 = vdwg.mxu0
    %v1500 = vrot.slane %v1424, 4
    %v1501 = vrot.slane %v1426, 4
    %v1504 = vadd.f32 %v199, %v1500
    %v1505 = vadd.f32 %v201, %v1501
    %v1506 = vxor.u32 %v1504, 2147483648
    %v1507 = vxor.u32 %v1505, 2147483648
    %v1508 = vmul.f32 %v1506, 1.442695
    %v1509 = vpow.pop %v1508
    %v1510 = vmul.f32 %v1507, 1.442695
    %v1511 = vpow.pop %v1510
    %v1512 = vadd.f32 %v1509, 1.0
    %v1513 = vadd.f32 %v1511, 1.0
    %v1514 = vrcp.pop %v1512
    %v1515 = vmul.f32 1.0, %v1514
    %v1516 = vrcp.pop %v1513
    %v1517 = vmul.f32 1.0, %v1516
    %v1518 = vadd.f32 %v1495, %v465
    %v1520 = vrot.slane %v1518, 4
    %v1522 = vmul.f32 %v1515, %v1520
    %v1523 = vadd.f32 %v275, %v1522
    %v1524 = vtanh.pop %v1523
    %v1525 = vsub.f32 1.0, %v1517
    %v1526 = vmul.f32 %v1525, %v1524
    %v1527 = vrot.slane %v1352, 6
    %v1529 = vmul.f32 %v1517, %v1527
    %v1530 = vadd.f32 %v1526, %v1529
    %v1532 = vrot.slane %v1530, 4
    %v1533 = vsel %vm119, %v1532, 0
    %1535 = vmatprep.subr.mxu0 %v279
    %1536 = vmatpush1.msra.mxu0 %v278
    %1537 = vmatprep.subr.mxu0 %v282
    %1538 = vmatpush1.msra.mxu0 %v281
    %1539 = vmatprep.subr.mxu0 %v285
    %1540 = vmatpush1.msra.mxu0 %v284
    %1541 = vmatprep.subr.mxu0 %v288
    %1542 = vmatpush1.msra.mxu0 %v287
    %1543 = vmatprep.subr.mxu0 %v291
    %1544 = vmatpush1.msra.mxu0 %v290
    %1545 = vmatprep.subr.mxu0 %v294
    %1546 = vmatpush1.msra.mxu0 %v293
    %1547 = vmatprep.subr.mxu0 %v297
    %1548 = vmatpush1.msra.mxu0 %v296
    %1549 = vmatprep.subr.mxu0 %v300
    %1550 = vmatpush1.msra.mxu0 %v299
    %1551 = vmatprep.subr.mxu0 0.0
    %1552 = vmatpush1.msra.mxu0 0.0
    %1553 = vmatprep.subr.mxu0 0.0
    %1554 = vmatpush1.msra.mxu0 0.0
    %1555 = vmatprep.subr.mxu0 0.0
    %1556 = vmatpush1.msra.mxu0 0.0
    %1557 = vmatprep.subr.mxu0 0.0
    %1558 = vmatpush1.msra.mxu0 0.0
    %1559 = vmatprep.subr.mxu0 0.0
    %1560 = vmatpush1.msra.mxu0 0.0
    %1561 = vmatprep.subr.mxu0 0.0
    %1562 = vmatpush1.msra.mxu0 0.0
    %1563 = vmatprep.subr.mxu0 0.0
    %1564 = vmatpush1.msra.mxu0 0.0
    %1565 = vmatprep.subr.mxu0 0.0
    %1566 = vmatpush1.msra.mxu0 0.0
    %1567 = vmatprep.subr.mxu0 0.0
    %1568 = vmatpush1.msra.mxu0 0.0
    %1569 = vmatprep.subr.mxu0 0.0
    %1570 = vmatpush1.msra.mxu0 0.0
    %1571 = vmatprep.subr.mxu0 0.0
    %1572 = vmatpush1.msra.mxu0 0.0
    %1573 = vmatprep.subr.mxu0 0.0
    %1574 = vmatpush1.msra.mxu0 0.0
    %1575 = vmatprep.subr.mxu0 0.0
    %1576 = vmatpush1.msra.mxu0 0.0
    %1577 = vmatprep.subr.mxu0 0.0
    %1578 = vmatpush1.msra.mxu0 0.0
    %1579 = vmatprep.subr.mxu0 0.0
    %1580 = vmatpush1.msra.mxu0 0.0
    %1581 = vmatprep.subr.mxu0 0.0
    %1582 = vmatpush1.msra.mxu0 0.0
    %1583 = vmatprep.subr.mxu0 0.0
    %1584 = vmatpush1.msra.mxu0 0.0
    %1585 = vmatprep.subr.mxu0 0.0
    %1586 = vmatpush1.msra.mxu0 0.0
    %1587 = vmatprep.subr.mxu0 0.0
    %1588 = vmatpush1.msra.mxu0 0.0
    %1589 = vmatprep.subr.mxu0 0.0
    %1590 = vmatpush1.msra.mxu0 0.0
    %1591 = vmatprep.subr.mxu0 0.0
    %1592 = vmatpush1.msra.mxu0 0.0
    %1593 = vmatprep.subr.mxu0 0.0
    %1594 = vmatpush1.msra.mxu0 0.0
    %1595 = vmatprep.subr.mxu0 0.0
    %1596 = vmatpush1.msra.mxu0 0.0
    %1597 = vmatprep.subr.mxu0 0.0
    %1598 = vmatpush1.msra.mxu0 0.0
    %1599 = vmatprep.mubr.f32.mxu0 0.0
    %1600 = vmatmul.mubr.f32.gmra.mrb[0].mxu0 %v1533
    %v1601 = vpop.f32.mrb[0].mxu0
    %v1602 = vadd.f32 0.0, %v1601
    %v1603 = vpop.f32.mrb[0].mxu0
    %v1604 = vadd.f32 0.0, %v1603
    %1605 = vdwg.mxu0
    %1606 = vmatprep.subr.mxu0 0.0
    %1607 = vmatpush1.msra.mxu0 %v280
    %1608 = vmatprep.subr.mxu0 0.0
    %1609 = vmatpush1.msra.mxu0 %v283
    %1610 = vmatprep.subr.mxu0 0.0
    %1611 = vmatpush1.msra.mxu0 %v286
    %1612 = vmatprep.subr.mxu0 0.0
    %1613 = vmatpush1.msra.mxu0 %v289
    %1614 = vmatprep.subr.mxu0 0.0
    %1615 = vmatpush1.msra.mxu0 %v292
    %1616 = vmatprep.subr.mxu0 0.0
    %1617 = vmatpush1.msra.mxu0 %v295
    %1618 = vmatprep.subr.mxu0 0.0
    %1619 = vmatpush1.msra.mxu0 %v298
    %1620 = vmatprep.subr.mxu0 0.0
    %1621 = vmatpush1.msra.mxu0 %v301
    %1622 = vmatprep.subr.mxu0 0.0
    %1623 = vmatpush1.msra.mxu0 0.0
    %1624 = vmatprep.subr.mxu0 0.0
    %1625 = vmatpush1.msra.mxu0 0.0
    %1626 = vmatprep.subr.mxu0 0.0
    %1627 = vmatpush1.msra.mxu0 0.0
    %1628 = vmatprep.subr.mxu0 0.0
    %1629 = vmatpush1.msra.mxu0 0.0
    %1630 = vmatprep.subr.mxu0 0.0
    %1631 = vmatpush1.msra.mxu0 0.0
    %1632 = vmatprep.subr.mxu0 0.0
    %1633 = vmatpush1.msra.mxu0 0.0
    %1634 = vmatprep.subr.mxu0 0.0
    %1635 = vmatpush1.msra.mxu0 0.0
    %1636 = vmatprep.subr.mxu0 0.0
    %1637 = vmatpush1.msra.mxu0 0.0
    %1638 = vmatprep.subr.mxu0 0.0
    %1639 = vmatpush1.msra.mxu0 0.0
    %1640 = vmatprep.subr.mxu0 0.0
    %1641 = vmatpush1.msra.mxu0 0.0
    %1642 = vmatprep.subr.mxu0 0.0
    %1643 = vmatpush1.msra.mxu0 0.0
    %1644 = vmatprep.subr.mxu0 0.0
    %1645 = vmatpush1.msra.mxu0 0.0
    %1646 = vmatprep.subr.mxu0 0.0
    %1647 = vmatpush1.msra.mxu0 0.0
    %1648 = vmatprep.subr.mxu0 0.0
    %1649 = vmatpush1.msra.mxu0 0.0
    %1650 = vmatprep.subr.mxu0 0.0
    %1651 = vmatpush1.msra.mxu0 0.0
    %1652 = vmatprep.subr.mxu0 0.0
    %1653 = vmatpush1.msra.mxu0 0.0
    %1654 = vmatprep.subr.mxu0 0.0
    %1655 = vmatpush1.msra.mxu0 0.0
    %1656 = vmatprep.subr.mxu0 0.0
    %1657 = vmatpush1.msra.mxu0 0.0
    %1658 = vmatprep.subr.mxu0 0.0
    %1659 = vmatpush1.msra.mxu0 0.0
    %1660 = vmatprep.subr.mxu0 0.0
    %1661 = vmatpush1.msra.mxu0 0.0
    %1662 = vmatprep.subr.mxu0 0.0
    %1663 = vmatpush1.msra.mxu0 0.0
    %1664 = vmatprep.subr.mxu0 0.0
    %1665 = vmatpush1.msra.mxu0 0.0
    %1666 = vmatprep.subr.mxu0 0.0
    %1667 = vmatpush1.msra.mxu0 0.0
    %1668 = vmatprep.subr.mxu0 0.0
    %1669 = vmatpush1.msra.mxu0 0.0
    %1670 = vmatprep.mubr.f32.mxu0 0.0
    %1671 = vmatmul.mubr.f32.gmra.mrb[0].mxu0 %v1533
    %v1672 = vpop.f32.mrb[0].mxu0
    %v1673 = vadd.f32 0.0, %v1672
    %v1674 = vpop.f32.mrb[0].mxu0
    %1675 = vdwg.mxu0
    %v1678 = vrot.slane %v1602, 2
    %v1679 = vrot.slane %v1604, 2
    %v1682 = vadd.f32 %v199, %v1678
    %v1683 = vadd.f32 %v201, %v1679
    %v1684 = vxor.u32 %v1682, 2147483648
    %v1685 = vxor.u32 %v1683, 2147483648
    %v1686 = vmul.f32 %v1684, 1.442695
    %v1687 = vpow.pop %v1686
    %v1688 = vmul.f32 %v1685, 1.442695
    %v1689 = vpow.pop %v1688
    %v1690 = vadd.f32 %v1687, 1.0
    %v1691 = vadd.f32 %v1689, 1.0
    %v1692 = vrcp.pop %v1690
    %v1693 = vmul.f32 1.0, %v1692
    %v1694 = vrcp.pop %v1691
    %v1695 = vmul.f32 1.0, %v1694
    %v1696 = vadd.f32 %v1673, %v465
    %v1698 = vrot.slane %v1696, 2
    %v1700 = vmul.f32 %v1693, %v1698
    %v1701 = vadd.f32 %v275, %v1700
    %v1702 = vtanh.pop %v1701
    %v1703 = vsub.f32 1.0, %v1695
    %v1704 = vmul.f32 %v1703, %v1702
    %v1705 = vrot.slane %v1530, 6
    %v1707 = vmul.f32 %v1695, %v1705
    %v1708 = vadd.f32 %v1704, %v1707
    %s1709 = smul.u32 576, 1
    %s1710 = sshll.u32 %s1709, 4
    %1711 = dma.done [#allocation3], %s1710
    %v1712 = vld [vmem:[#allocation2] sm:$0xff]
    %v1713 = vld [vmem:[#allocation2 + $0x8] sm:$0xff]
    %v1714 = vld [vmem:[#allocation2 + $0x10] sm:$0xff]
    %v1715 = vld [vmem:[#allocation2 + $0x18] sm:$0xff]
    %v1716 = vld [vmem:[#allocation2 + $0x20] sm:$0xff]
    %v1717 = vld [vmem:[#allocation2 + $0x28] sm:$0xff]
    %v1718 = vld [vmem:[#allocation2 + $0x30] sm:$0xff]
    %v1719 = vld [vmem:[#allocation2 + $0x38] sm:$0xff]
    %v1720 = vld [vmem:[%s5] sm:$0x1]
    %v1721 = vlaneseq
    %v1722 = vshrl.u32 %v1721, 7
    %v1723 = vsub.s32 0, %v1722
    %v1724 = vrot.slane %v1720, %v1723
    %v1726 = vrot.slane %v1708, 6
    %v1727 = vsel %vm119, %v1726, 0
    %1729 = vmatprep.subr.mxu0 0.0
    %1730 = vmatpush1.msra.mxu0 %v1712
    %1731 = vmatprep.subr.mxu0 0.0
    %1732 = vmatpush1.msra.mxu0 %v1713
    %1733 = vmatprep.subr.mxu0 0.0
    %1734 = vmatpush1.msra.mxu0 %v1714
    %1735 = vmatprep.subr.mxu0 0.0
    %1736 = vmatpush1.msra.mxu0 %v1715
    %1737 = vmatprep.subr.mxu0 0.0
    %1738 = vmatpush1.msra.mxu0 %v1716
    %1739 = vmatprep.subr.mxu0 0.0
    %1740 = vmatpush1.msra.mxu0 %v1717
    %1741 = vmatprep.subr.mxu0 0.0
    %1742 = vmatpush1.msra.mxu0 %v1718
    %1743 = vmatprep.subr.mxu0 0.0
    %1744 = vmatpush1.msra.mxu0 %v1719
    %1745 = vmatprep.subr.mxu0 0.0
    %1746 = vmatpush1.msra.mxu0 0.0
    %1747 = vmatprep.subr.mxu0 0.0
    %1748 = vmatpush1.msra.mxu0 0.0
    %1749 = vmatprep.subr.mxu0 0.0
    %1750 = vmatpush1.msra.mxu0 0.0
    %1751 = vmatprep.subr.mxu0 0.0
    %1752 = vmatpush1.msra.mxu0 0.0
    %1753 = vmatprep.subr.mxu0 0.0
    %1754 = vmatpush1.msra.mxu0 0.0
    %1755 = vmatprep.subr.mxu0 0.0
    %1756 = vmatpush1.msra.mxu0 0.0
    %1757 = vmatprep.subr.mxu0 0.0
    %1758 = vmatpush1.msra.mxu0 0.0
    %1759 = vmatprep.subr.mxu0 0.0
    %1760 = vmatpush1.msra.mxu0 0.0
    %1761 = vmatprep.subr.mxu0 0.0
    %1762 = vmatpush1.msra.mxu0 0.0
    %1763 = vmatprep.subr.mxu0 0.0
    %1764 = vmatpush1.msra.mxu0 0.0
    %1765 = vmatprep.subr.mxu0 0.0
    %1766 = vmatpush1.msra.mxu0 0.0
    %1767 = vmatprep.subr.mxu0 0.0
    %1768 = vmatpush1.msra.mxu0 0.0
    %1769 = vmatprep.subr.mxu0 0.0
    %1770 = vmatpush1.msra.mxu0 0.0
    %1771 = vmatprep.subr.mxu0 0.0
    %1772 = vmatpush1.msra.mxu0 0.0
    %1773 = vmatprep.subr.mxu0 0.0
    %1774 = vmatpush1.msra.mxu0 0.0
    %1775 = vmatprep.subr.mxu0 0.0
    %1776 = vmatpush1.msra.mxu0 0.0
    %1777 = vmatprep.subr.mxu0 0.0
    %1778 = vmatpush1.msra.mxu0 0.0
    %1779 = vmatprep.subr.mxu0 0.0
    %1780 = vmatpush1.msra.mxu0 0.0
    %1781 = vmatprep.subr.mxu0 0.0
    %1782 = vmatpush1.msra.mxu0 0.0
    %1783 = vmatprep.subr.mxu0 0.0
    %1784 = vmatpush1.msra.mxu0 0.0
    %1785 = vmatprep.subr.mxu0 0.0
    %1786 = vmatpush1.msra.mxu0 0.0
    %1787 = vmatprep.subr.mxu0 0.0
    %1788 = vmatpush1.msra.mxu0 0.0
    %1789 = vmatprep.subr.mxu0 0.0
    %1790 = vmatpush1.msra.mxu0 0.0
    %1791 = vmatprep.subr.mxu0 0.0
    %1792 = vmatpush1.msra.mxu0 0.0
    %1793 = vmatprep.mubr.f32.mxu0 0.0
    %1794 = vmatmul.mubr.f32.gmra.mrb[0].mxu0 %v1727
    %v1795 = vpop.f32.mrb[0].mxu0
    %v1796 = vadd.f32 %v1724, %v1795
    %v1797 = vpop.f32.mrb[0].mxu0
    %1798 = vdwg.mxu0
    %vm1799 = vcmp.gt.f32.partialorder %v1796, 0.0
    %v1800 = vmul.f32 %v1796, 0.01
    %v1801 = vsel %vm1799, %v1796, %v1800
    %v1802 = vld [vmem:[#allocation2 + $0x40] sm:$0xff]
    %v1803 = vld [vmem:[#allocation2 + $0x48] sm:$0xff]
    %v1804 = vld [vmem:[#allocation2 + $0x50] sm:$0xff]
    %v1805 = vld [vmem:[#allocation2 + $0x58] sm:$0xff]
    %v1806 = vld [vmem:[#allocation2 + $0x60] sm:$0xff]
    %v1807 = vld [vmem:[#allocation2 + $0x68] sm:$0xff]
    %v1808 = vld [vmem:[#allocation2 + $0x70] sm:$0xff]
    %v1809 = vld [vmem:[#allocation2 + $0x78] sm:$0xff]
    %v1810 = vld [vmem:[%s5 + $0x1] sm:$0x1]
    %v1811 = vlaneseq
    %v1812 = vshrl.u32 %v1811, 7
    %v1813 = vsub.s32 0, %v1812
    %v1814 = vrot.slane %v1810, %v1813
    %1815 = vmatprep.subr.mxu0 0.0
    %1816 = vmatpush1.msra.mxu0 %v1802
    %1817 = vmatprep.subr.mxu0 0.0
    %1818 = vmatpush1.msra.mxu0 %v1803
    %1819 = vmatprep.subr.mxu0 0.0
    %1820 = vmatpush1.msra.mxu0 %v1804
    %1821 = vmatprep.subr.mxu0 0.0
    %1822 = vmatpush1.msra.mxu0 %v1805
    %1823 = vmatprep.subr.mxu0 0.0
    %1824 = vmatpush1.msra.mxu0 %v1806
    %1825 = vmatprep.subr.mxu0 0.0
    %1826 = vmatpush1.msra.mxu0 %v1807
    %1827 = vmatprep.subr.mxu0 0.0
    %1828 = vmatpush1.msra.mxu0 %v1808
    %1829 = vmatprep.subr.mxu0 0.0
    %1830 = vmatpush1.msra.mxu0 %v1809
    %1831 = vmatprep.subr.mxu0 0.0
    %1832 = vmatpush1.msra.mxu0 0.0
    %1833 = vmatprep.subr.mxu0 0.0
    %1834 = vmatpush1.msra.mxu0 0.0
    %1835 = vmatprep.subr.mxu0 0.0
    %1836 = vmatpush1.msra.mxu0 0.0
    %1837 = vmatprep.subr.mxu0 0.0
    %1838 = vmatpush1.msra.mxu0 0.0
    %1839 = vmatprep.subr.mxu0 0.0
    %1840 = vmatpush1.msra.mxu0 0.0
    %1841 = vmatprep.subr.mxu0 0.0
    %1842 = vmatpush1.msra.mxu0 0.0
    %1843 = vmatprep.subr.mxu0 0.0
    %1844 = vmatpush1.msra.mxu0 0.0
    %1845 = vmatprep.subr.mxu0 0.0
    %1846 = vmatpush1.msra.mxu0 0.0
    %1847 = vmatprep.subr.mxu0 0.0
    %1848 = vmatpush1.msra.mxu0 0.0
    %1849 = vmatprep.subr.mxu0 0.0
    %1850 = vmatpush1.msra.mxu0 0.0
    %1851 = vmatprep.subr.mxu0 0.0
    %1852 = vmatpush1.msra.mxu0 0.0
    %1853 = vmatprep.subr.mxu0 0.0
    %1854 = vmatpush1.msra.mxu0 0.0
    %1855 = vmatprep.subr.mxu0 0.0
    %1856 = vmatpush1.msra.mxu0 0.0
    %1857 = vmatprep.subr.mxu0 0.0
    %1858 = vmatpush1.msra.mxu0 0.0
    %1859 = vmatprep.subr.mxu0 0.0
    %1860 = vmatpush1.msra.mxu0 0.0
    %1861 = vmatprep.subr.mxu0 0.0
    %1862 = vmatpush1.msra.mxu0 0.0
    %1863 = vmatprep.subr.mxu0 0.0
    %1864 = vmatpush1.msra.mxu0 0.0
    %1865 = vmatprep.subr.mxu0 0.0
    %1866 = vmatpush1.msra.mxu0 0.0
    %1867 = vmatprep.subr.mxu0 0.0
    %1868 = vmatpush1.msra.mxu0 0.0
    %1869 = vmatprep.subr.mxu0 0.0
    %1870 = vmatpush1.msra.mxu0 0.0
    %1871 = vmatprep.subr.mxu0 0.0
    %1872 = vmatpush1.msra.mxu0 0.0
    %1873 = vmatprep.subr.mxu0 0.0
    %1874 = vmatpush1.msra.mxu0 0.0
    %1875 = vmatprep.subr.mxu0 0.0
    %1876 = vmatpush1.msra.mxu0 0.0
    %1877 = vmatprep.subr.mxu0 0.0
    %1878 = vmatpush1.msra.mxu0 0.0
    %1879 = vmatprep.mubr.f32.mxu0 0.0
    %1880 = vmatmul.mubr.f32.gmra.mrb[0].mxu0 %v1727
    %v1881 = vpop.f32.mrb[0].mxu0
    %v1882 = vadd.f32 %v1814, %v1881
    %v1883 = vpop.f32.mrb[0].mxu0
    %1884 = vdwg.mxu0
    %vm1885 = vcmp.gt.f32.partialorder %v1882, 0.0
    %v1886 = vmul.f32 %v1882, 0.01
    %v1887 = vsel %vm1885, %v1882, %v1886
    %v1888 = vld [vmem:[#allocation2 + $0x80] sm:$0xff]
    %v1889 = vld [vmem:[#allocation2 + $0x88] sm:$0xff]
    %v1890 = vld [vmem:[#allocation2 + $0x90] sm:$0xff]
    %v1891 = vld [vmem:[#allocation2 + $0x98] sm:$0xff]
    %v1892 = vld [vmem:[#allocation2 + $0xa0] sm:$0xff]
    %v1893 = vld [vmem:[#allocation2 + $0xa8] sm:$0xff]
    %v1894 = vld [vmem:[#allocation2 + $0xb0] sm:$0xff]
    %v1895 = vld [vmem:[#allocation2 + $0xb8] sm:$0xff]
    %v1896 = vld [vmem:[#allocation2 + $0xc0] sm:$0xff]
    %v1897 = vld [vmem:[#allocation2 + $0xc8] sm:$0xff]
    %v1898 = vld [vmem:[#allocation2 + $0xd0] sm:$0xff]
    %v1899 = vld [vmem:[#allocation2 + $0xd8] sm:$0xff]
    %v1900 = vld [vmem:[#allocation2 + $0xe0] sm:$0xff]
    %v1901 = vld [vmem:[#allocation2 + $0xe8] sm:$0xff]
    %v1902 = vld [vmem:[#allocation2 + $0xf0] sm:$0xff]
    %v1903 = vld [vmem:[#allocation2 + $0xf8] sm:$0xff]
    %v1904 = vld [vmem:[#allocation2 + $0x100] sm:$0xff]
    %v1905 = vld [vmem:[#allocation2 + $0x108] sm:$0xff]
    %v1906 = vld [vmem:[#allocation2 + $0x110] sm:$0xff]
    %v1907 = vld [vmem:[#allocation2 + $0x118] sm:$0xff]
    %v1908 = vld [vmem:[#allocation2 + $0x120] sm:$0xff]
    %v1909 = vld [vmem:[#allocation2 + $0x128] sm:$0xff]
    %v1910 = vld [vmem:[#allocation2 + $0x130] sm:$0xff]
    %v1911 = vld [vmem:[#allocation2 + $0x138] sm:$0xff]
    %v1912 = vld [vmem:[#allocation2 + $0x140] sm:$0xff]
    %v1913 = vld [vmem:[#allocation2 + $0x148] sm:$0xff]
    %v1914 = vld [vmem:[#allocation2 + $0x150] sm:$0xff]
    %v1915 = vld [vmem:[#allocation2 + $0x158] sm:$0xff]
    %v1916 = vld [vmem:[#allocation2 + $0x160] sm:$0xff]
    %v1917 = vld [vmem:[#allocation2 + $0x168] sm:$0xff]
    %v1918 = vld [vmem:[#allocation2 + $0x170] sm:$0xff]
    %v1919 = vld [vmem:[#allocation2 + $0x178] sm:$0xff]
    %1920 = vmatprep.subr.mxu0 0.0
    %1921 = vmatpush1.msra.mxu0 %v1904
    %1922 = vmatprep.subr.mxu0 0.0
    %1923 = vmatpush1.msra.mxu0 %v1905
    %1924 = vmatprep.subr.mxu0 0.0
    %1925 = vmatpush1.msra.mxu0 %v1906
    %1926 = vmatprep.subr.mxu0 0.0
    %1927 = vmatpush1.msra.mxu0 %v1907
    %1928 = vmatprep.subr.mxu0 0.0
    %1929 = vmatpush1.msra.mxu0 %v1908
    %1930 = vmatprep.subr.mxu0 0.0
    %1931 = vmatpush1.msra.mxu0 %v1909
    %1932 = vmatprep.subr.mxu0 0.0
    %1933 = vmatpush1.msra.mxu0 %v1910
    %1934 = vmatprep.subr.mxu0 0.0
    %1935 = vmatpush1.msra.mxu0 %v1911
    %1936 = vmatprep.subr.mxu0 0.0
    %1937 = vmatpush1.msra.mxu0 %v1912
    %1938 = vmatprep.subr.mxu0 0.0
    %1939 = vmatpush1.msra.mxu0 %v1913
    %1940 = vmatprep.subr.mxu0 0.0
    %1941 = vmatpush1.msra.mxu0 %v1914
    %1942 = vmatprep.subr.mxu0 0.0
    %1943 = vmatpush1.msra.mxu0 %v1915
    %1944 = vmatprep.subr.mxu0 0.0
    %1945 = vmatpush1.msra.mxu0 %v1916
    %1946 = vmatprep.subr.mxu0 0.0
    %1947 = vmatpush1.msra.mxu0 %v1917
    %1948 = vmatprep.subr.mxu0 0.0
    %1949 = vmatpush1.msra.mxu0 %v1918
    %1950 = vmatprep.subr.mxu0 0.0
    %1951 = vmatpush1.msra.mxu0 %v1919
    %1952 = vmatprep.subr.mxu0 0.0
    %1953 = vmatpush1.msra.mxu0 0.0
    %1954 = vmatprep.subr.mxu0 0.0
    %1955 = vmatpush1.msra.mxu0 0.0
    %1956 = vmatprep.subr.mxu0 0.0
    %1957 = vmatpush1.msra.mxu0 0.0
    %1958 = vmatprep.subr.mxu0 0.0
    %1959 = vmatpush1.msra.mxu0 0.0
    %1960 = vmatprep.subr.mxu0 0.0
    %1961 = vmatpush1.msra.mxu0 0.0
    %1962 = vmatprep.subr.mxu0 0.0
    %1963 = vmatpush1.msra.mxu0 0.0
    %1964 = vmatprep.subr.mxu0 0.0
    %1965 = vmatpush1.msra.mxu0 0.0
    %1966 = vmatprep.subr.mxu0 0.0
    %1967 = vmatpush1.msra.mxu0 0.0
    %1968 = vmatprep.subr.mxu0 0.0
    %1969 = vmatpush1.msra.mxu0 0.0
    %1970 = vmatprep.subr.mxu0 0.0
    %1971 = vmatpush1.msra.mxu0 0.0
    %1972 = vmatprep.subr.mxu0 0.0
    %1973 = vmatpush1.msra.mxu0 0.0
    %1974 = vmatprep.subr.mxu0 0.0
    %1975 = vmatpush1.msra.mxu0 0.0
    %1976 = vmatprep.subr.mxu0 0.0
    %1977 = vmatpush1.msra.mxu0 0.0
    %1978 = vmatprep.subr.mxu0 0.0
    %1979 = vmatpush1.msra.mxu0 0.0
    %1980 = vmatprep.subr.mxu0 0.0
    %1981 = vmatpush1.msra.mxu0 0.0
    %1982 = vmatprep.subr.mxu0 0.0
    %1983 = vmatpush1.msra.mxu0 0.0
    %1984 = vmatprep.mubr.f32.mxu0 0.0
    %1985 = vmatmul.mubr.f32.gmra.mrb[0].mxu0 %v1887
    %v1986 = vpop.f32.mrb[0].mxu0
    %v1987 = vadd.f32 0.0, %v1986
    %v1988 = vpop.f32.mrb[0].mxu0
    %1989 = vdwg.mxu0
    %1990 = vmatprep.subr.mxu0 0.0
    %1991 = vmatpush1.msra.mxu0 %v1888
    %1992 = vmatprep.subr.mxu0 0.0
    %1993 = vmatpush1.msra.mxu0 %v1889
    %1994 = vmatprep.subr.mxu0 0.0
    %1995 = vmatpush1.msra.mxu0 %v1890
    %1996 = vmatprep.subr.mxu0 0.0
    %1997 = vmatpush1.msra.mxu0 %v1891
    %1998 = vmatprep.subr.mxu0 0.0
    %1999 = vmatpush1.msra.mxu0 %v1892
    %2000 = vmatprep.subr.mxu0 0.0
    %2001 = vmatpush1.msra.mxu0 %v1893
    %2002 = vmatprep.subr.mxu0 0.0
    %2003 = vmatpush1.msra.mxu0 %v1894
    %2004 = vmatprep.subr.mxu0 0.0
    %2005 = vmatpush1.msra.mxu0 %v1895
    %2006 = vmatprep.subr.mxu0 0.0
    %2007 = vmatpush1.msra.mxu0 %v1896
    %2008 = vmatprep.subr.mxu0 0.0
    %2009 = vmatpush1.msra.mxu0 %v1897
    %2010 = vmatprep.subr.mxu0 0.0
    %2011 = vmatpush1.msra.mxu0 %v1898
    %2012 = vmatprep.subr.mxu0 0.0
    %2013 = vmatpush1.msra.mxu0 %v1899
    %2014 = vmatprep.subr.mxu0 0.0
    %2015 = vmatpush1.msra.mxu0 %v1900
    %2016 = vmatprep.subr.mxu0 0.0
    %2017 = vmatpush1.msra.mxu0 %v1901
    %2018 = vmatprep.subr.mxu0 0.0
    %2019 = vmatpush1.msra.mxu0 %v1902
    %2020 = vmatprep.subr.mxu0 0.0
    %2021 = vmatpush1.msra.mxu0 %v1903
    %2022 = vmatprep.subr.mxu0 0.0
    %2023 = vmatpush1.msra.mxu0 0.0
    %2024 = vmatprep.subr.mxu0 0.0
    %2025 = vmatpush1.msra.mxu0 0.0
    %2026 = vmatprep.subr.mxu0 0.0
    %2027 = vmatpush1.msra.mxu0 0.0
    %2028 = vmatprep.subr.mxu0 0.0
    %2029 = vmatpush1.msra.mxu0 0.0
    %2030 = vmatprep.subr.mxu0 0.0
    %2031 = vmatpush1.msra.mxu0 0.0
    %2032 = vmatprep.subr.mxu0 0.0
    %2033 = vmatpush1.msra.mxu0 0.0
    %2034 = vmatprep.subr.mxu0 0.0
    %2035 = vmatpush1.msra.mxu0 0.0
    %2036 = vmatprep.subr.mxu0 0.0
    %2037 = vmatpush1.msra.mxu0 0.0
    %2038 = vmatprep.subr.mxu0 0.0
    %2039 = vmatpush1.msra.mxu0 0.0
    %2040 = vmatprep.subr.mxu0 0.0
    %2041 = vmatpush1.msra.mxu0 0.0
    %2042 = vmatprep.subr.mxu0 0.0
    %2043 = vmatpush1.msra.mxu0 0.0
    %2044 = vmatprep.subr.mxu0 0.0
    %2045 = vmatpush1.msra.mxu0 0.0
    %2046 = vmatprep.subr.mxu0 0.0
    %2047 = vmatpush1.msra.mxu0 0.0
    %2048 = vmatprep.subr.mxu0 0.0
    %2049 = vmatpush1.msra.mxu0 0.0
    %2050 = vmatprep.subr.mxu0 0.0
    %2051 = vmatpush1.msra.mxu0 0.0
    %2052 = vmatprep.subr.mxu0 0.0
    %2053 = vmatpush1.msra.mxu0 0.0
    %2054 = vmatprep.mubr.f32.mxu0 0.0
    %2055 = vmatmul.mubr.f32.gmra.mrb[0].mxu0 %v1801
    %v2056 = vpop.f32.mrb[0].mxu0
    %v2057 = vadd.f32 %v1987, %v2056
    %v2058 = vpop.f32.mrb[0].mxu0
    %2059 = vdwg.mxu0
    %v2060 = vld [vmem:[%s5 + $0x2] sm:$0x1]
    %v2061 = vlaneseq
    %v2062 = vshrl.u32 %v2061, 7
    %v2063 = vsub.s32 0, %v2062
    %v2064 = vrot.slane %v2060, %v2063
    %v2065 = vadd.f32 %v2057, %v2064
    %vm2066 = vcmp.gt.f32.partialorder %v2065, 0.0
    %v2067 = vmul.f32 %v2065, 0.01
    %v2068 = vsel %vm2066, %v2065, %v2067
    %v2069 = vld [vmem:[#allocation2 + $0x180] sm:$0xff]
    %v2070 = vld [vmem:[#allocation2 + $0x188] sm:$0xff]
    %v2071 = vld [vmem:[#allocation2 + $0x190] sm:$0xff]
    %v2072 = vld [vmem:[#allocation2 + $0x198] sm:$0xff]
    %v2073 = vld [vmem:[#allocation2 + $0x1a0] sm:$0xff]
    %v2074 = vld [vmem:[#allocation2 + $0x1a8] sm:$0xff]
    %v2075 = vld [vmem:[#allocation2 + $0x1b0] sm:$0xff]
    %v2076 = vld [vmem:[#allocation2 + $0x1b8] sm:$0xff]
    %v2077 = vld [vmem:[#allocation2 + $0x1c0] sm:$0xff]
    %v2078 = vld [vmem:[#allocation2 + $0x1c8] sm:$0xff]
    %v2079 = vld [vmem:[#allocation2 + $0x1d0] sm:$0xff]
    %v2080 = vld [vmem:[#allocation2 + $0x1d8] sm:$0xff]
    %v2081 = vld [vmem:[#allocation2 + $0x1e0] sm:$0xff]
    %v2082 = vld [vmem:[#allocation2 + $0x1e8] sm:$0xff]
    %v2083 = vld [vmem:[#allocation2 + $0x1f0] sm:$0xff]
    %v2084 = vld [vmem:[#allocation2 + $0x1f8] sm:$0xff]
    %v2085 = vld [vmem:[%s5 + $0x3] sm:$0x1]
    %v2086 = vlaneseq
    %v2087 = vshrl.u32 %v2086, 7
    %v2088 = vsub.s32 0, %v2087
    %v2089 = vrot.slane %v2085, %v2088
    %2090 = vmatprep.subr.mxu0 0.0
    %2091 = vmatpush1.msra.mxu0 %v2069
    %2092 = vmatprep.subr.mxu0 0.0
    %2093 = vmatpush1.msra.mxu0 %v2070
    %2094 = vmatprep.subr.mxu0 0.0
    %2095 = vmatpush1.msra.mxu0 %v2071
    %2096 = vmatprep.subr.mxu0 0.0
    %2097 = vmatpush1.msra.mxu0 %v2072
    %2098 = vmatprep.subr.mxu0 0.0
    %2099 = vmatpush1.msra.mxu0 %v2073
    %2100 = vmatprep.subr.mxu0 0.0
    %2101 = vmatpush1.msra.mxu0 %v2074
    %2102 = vmatprep.subr.mxu0 0.0
    %2103 = vmatpush1.msra.mxu0 %v2075
    %2104 = vmatprep.subr.mxu0 0.0
    %2105 = vmatpush1.msra.mxu0 %v2076
    %2106 = vmatprep.subr.mxu0 0.0
    %2107 = vmatpush1.msra.mxu0 %v2077
    %2108 = vmatprep.subr.mxu0 0.0
    %2109 = vmatpush1.msra.mxu0 %v2078
    %2110 = vmatprep.subr.mxu0 0.0
    %2111 = vmatpush1.msra.mxu0 %v2079
    %2112 = vmatprep.subr.mxu0 0.0
    %2113 = vmatpush1.msra.mxu0 %v2080
    %2114 = vmatprep.subr.mxu0 0.0
    %2115 = vmatpush1.msra.mxu0 %v2081
    %2116 = vmatprep.subr.mxu0 0.0
    %2117 = vmatpush1.msra.mxu0 %v2082
    %2118 = vmatprep.subr.mxu0 0.0
    %2119 = vmatpush1.msra.mxu0 %v2083
    %2120 = vmatprep.subr.mxu0 0.0
    %2121 = vmatpush1.msra.mxu0 %v2084
    %2122 = vmatprep.subr.mxu0 0.0
    %2123 = vmatpush1.msra.mxu0 0.0
    %2124 = vmatprep.subr.mxu0 0.0
    %2125 = vmatpush1.msra.mxu0 0.0
    %2126 = vmatprep.subr.mxu0 0.0
    %2127 = vmatpush1.msra.mxu0 0.0
    %2128 = vmatprep.subr.mxu0 0.0
    %2129 = vmatpush1.msra.mxu0 0.0
    %2130 = vmatprep.subr.mxu0 0.0
    %2131 = vmatpush1.msra.mxu0 0.0
    %2132 = vmatprep.subr.mxu0 0.0
    %2133 = vmatpush1.msra.mxu0 0.0
    %2134 = vmatprep.subr.mxu0 0.0
    %2135 = vmatpush1.msra.mxu0 0.0
    %2136 = vmatprep.subr.mxu0 0.0
    %2137 = vmatpush1.msra.mxu0 0.0
    %2138 = vmatprep.subr.mxu0 0.0
    %2139 = vmatpush1.msra.mxu0 0.0
    %2140 = vmatprep.subr.mxu0 0.0
    %2141 = vmatpush1.msra.mxu0 0.0
    %2142 = vmatprep.subr.mxu0 0.0
    %2143 = vmatpush1.msra.mxu0 0.0
    %2144 = vmatprep.subr.mxu0 0.0
    %2145 = vmatpush1.msra.mxu0 0.0
    %2146 = vmatprep.subr.mxu0 0.0
    %2147 = vmatpush1.msra.mxu0 0.0
    %2148 = vmatprep.subr.mxu0 0.0
    %2149 = vmatpush1.msra.mxu0 0.0
    %2150 = vmatprep.subr.mxu0 0.0
    %2151 = vmatpush1.msra.mxu0 0.0
    %2152 = vmatprep.subr.mxu0 0.0
    %2153 = vmatpush1.msra.mxu0 0.0
    %2154 = vmatprep.mubr.f32.mxu0 0.0
    %2155 = vmatmul.mubr.f32.gmra.mrb[0].mxu0 %v2068
    %v2156 = vpop.f32.mrb[0].mxu0
    %v2157 = vadd.f32 %v2089, %v2156
    %v2158 = vpop.f32.mrb[0].mxu0
    %2159 = vdwg.mxu0
    %vm2160 = vcmp.gt.f32.partialorder %v2157, 0.0
    %v2161 = vmul.f32 %v2157, 0.01
    %v2162 = vsel %vm2160, %v2157, %v2161
    %v2163 = vld [vmem:[#allocation2 + $0x200] sm:$0xff]
    %v2164 = vld [vmem:[#allocation2 + $0x208] sm:$0xff]
    %v2165 = vld [vmem:[#allocation2 + $0x210] sm:$0xff]
    %v2166 = vld [vmem:[#allocation2 + $0x218] sm:$0xff]
    %v2167 = vld [vmem:[#allocation2 + $0x220] sm:$0xff]
    %v2168 = vld [vmem:[#allocation2 + $0x228] sm:$0xff]
    %v2169 = vld [vmem:[#allocation2 + $0x230] sm:$0xff]
    %v2170 = vld [vmem:[#allocation2 + $0x238] sm:$0xff]
    %v2171 = vld [vmem:[%s5 + $0x4] sm:$0x1]
    %v2172 = vlaneseq
    %v2173 = vshrl.u32 %v2172, 7
    %v2174 = vsub.s32 0, %v2173
    %v2175 = vrot.slane %v2171, %v2174
    %v2177 = vsel %vm119, %v2162, 0
    %2179 = vmatprep.subr.mxu0 0.0
    %2180 = vmatpush1.msra.mxu0 %v2163
    %2181 = vmatprep.subr.mxu0 0.0
    %2182 = vmatpush1.msra.mxu0 %v2164
    %2183 = vmatprep.subr.mxu0 0.0
    %2184 = vmatpush1.msra.mxu0 %v2165
    %2185 = vmatprep.subr.mxu0 0.0
    %2186 = vmatpush1.msra.mxu0 %v2166
    %2187 = vmatprep.subr.mxu0 0.0
    %2188 = vmatpush1.msra.mxu0 %v2167
    %2189 = vmatprep.subr.mxu0 0.0
    %2190 = vmatpush1.msra.mxu0 %v2168
    %2191 = vmatprep.subr.mxu0 0.0
    %2192 = vmatpush1.msra.mxu0 %v2169
    %2193 = vmatprep.subr.mxu0 0.0
    %2194 = vmatpush1.msra.mxu0 %v2170
    %2195 = vmatprep.subr.mxu0 0.0
    %2196 = vmatpush1.msra.mxu0 0.0
    %2197 = vmatprep.subr.mxu0 0.0
    %2198 = vmatpush1.msra.mxu0 0.0
    %2199 = vmatprep.subr.mxu0 0.0
    %2200 = vmatpush1.msra.mxu0 0.0
    %2201 = vmatprep.subr.mxu0 0.0
    %2202 = vmatpush1.msra.mxu0 0.0
    %2203 = vmatprep.subr.mxu0 0.0
    %2204 = vmatpush1.msra.mxu0 0.0
    %2205 = vmatprep.subr.mxu0 0.0
    %2206 = vmatpush1.msra.mxu0 0.0
    %2207 = vmatprep.subr.mxu0 0.0
    %2208 = vmatpush1.msra.mxu0 0.0
    %2209 = vmatprep.subr.mxu0 0.0
    %2210 = vmatpush1.msra.mxu0 0.0
    %2211 = vmatprep.subr.mxu0 0.0
    %2212 = vmatpush1.msra.mxu0 0.0
    %2213 = vmatprep.subr.mxu0 0.0
    %2214 = vmatpush1.msra.mxu0 0.0
    %2215 = vmatprep.subr.mxu0 0.0
    %2216 = vmatpush1.msra.mxu0 0.0
    %2217 = vmatprep.subr.mxu0 0.0
    %2218 = vmatpush1.msra.mxu0 0.0
    %2219 = vmatprep.subr.mxu0 0.0
    %2220 = vmatpush1.msra.mxu0 0.0
    %2221 = vmatprep.subr.mxu0 0.0
    %2222 = vmatpush1.msra.mxu0 0.0
    %2223 = vmatprep.subr.mxu0 0.0
    %2224 = vmatpush1.msra.mxu0 0.0
    %2225 = vmatprep.subr.mxu0 0.0
    %2226 = vmatpush1.msra.mxu0 0.0
    %2227 = vmatprep.subr.mxu0 0.0
    %2228 = vmatpush1.msra.mxu0 0.0
    %2229 = vmatprep.subr.mxu0 0.0
    %2230 = vmatpush1.msra.mxu0 0.0
    %2231 = vmatprep.subr.mxu0 0.0
    %2232 = vmatpush1.msra.mxu0 0.0
    %2233 = vmatprep.subr.mxu0 0.0
    %2234 = vmatpush1.msra.mxu0 0.0
    %2235 = vmatprep.subr.mxu0 0.0
    %2236 = vmatpush1.msra.mxu0 0.0
    %2237 = vmatprep.subr.mxu0 0.0
    %2238 = vmatpush1.msra.mxu0 0.0
    %2239 = vmatprep.subr.mxu0 0.0
    %2240 = vmatpush1.msra.mxu0 0.0
    %2241 = vmatprep.subr.mxu0 0.0
    %2242 = vmatpush1.msra.mxu0 0.0
    %2243 = vmatprep.mubr.f32.mxu0 0.0
    %2244 = vmatmul.mubr.f32.gmra.mrb[0].mxu0 %v2177
    %v2245 = vpop.f32.mrb[0].mxu0
    %v2246 = vadd.f32 %v2175, %v2245
    %v2247 = vpop.f32.mrb[0].mxu0
    %2248 = vdwg.mxu0
    %v2249 = vxor.u32 %v2246, 2147483648
    %v2250 = vmul.f32 %v2249, 1.442695
    %v2251 = vpow.pop %v2250
    %v2252 = vadd.f32 %v2251, 1.0
    %v2253 = vrcp.pop %v2252
    %v2254 = vmul.f32 1.0, %v2253
    %vm2255 = vcmask 1024
    %2256 = vst.msk [vmem:[%s7] sm:$0x3] %vm2255, %v2254
    // Predicated region
    $region42: #{tpu_custom_call.1} parent=1 // pred_check
      _
    $region43: #{tpu_custom_call.1} parent=1 // pred_check_branch
      %2258 = sbr.rel (0) target = $region45
    $region44: #{tpu_custom_call.1} parent=1 // pred_region
      _
    $region45: #{tpu_custom_call.1} parent=1 // pred_fallthru
      _
    // Predicated region
    $region46: #{tpu_custom_call.1} parent=1 // pred_check
      _
    $region47: #{tpu_custom_call.1} parent=1 // pred_check_branch
      %2260 = sbr.rel (0) target = $region49
    $region48: #{tpu_custom_call.1} parent=1 // pred_region
      _
    $region49: #{tpu_custom_call.1} parent=1 // pred_fallthru
      _
    %2261 = vsyncpa [#allocation5], 1
    %2262 = vsyncpa [#allocation7], 1
  %2263 = vsyncmov [#allocation3]
  %s2264 = vpop.sfrf %2263
  %p2265 = scmp.eq.s32.totalorder %s2264, 0
  %p2266 = pneg %p2265
  %2268 = shalt.err (%p2266)

</llo_original>
